<compile_context>
chip_gen: v7x
topology: tpu7x:2x2x1
jax: 0.10.0
libtpu: 0.0.40
codegen_flags: <defaults>
</compile_context>

<pallas_src>
import functools

import jax
import jax.numpy as jnp
from jax.experimental import pallas as pl
from jax.experimental.pallas import tpu as pltpu


_STEM_C = 64          # stem conv output channels
_ENC_C = 2048         # encoder (stand-in) output channels = 512 * 4
_KP = 256             # im2col K (4*7*7 = 196) padded to a lane multiple
_NP = 128             # classifier output columns padded to one lane tile


def _round_up(x, m):
    return ((x + m - 1) // m) * m


# --------------------------------------------------------------------------
# Fused Pallas kernel:
#   feat = patches_tile @ w_inp        (stem Conv2d(4,64,7,s=2,p=3), im2col'd)
#   z    = relu(feat @ w_enc)          (encoder body stand-in, 1x1 conv)
#   acc += sum(z, spatial)             (global average pool, running sum)
#   last spatial tile:
#   out  = (acc / S) @ w_fc + b_fc     (classify_fc)
# --------------------------------------------------------------------------
def _ppnet_fused_kernel(patches_ref, w_inp_ref, w_enc_ref, w_fc_ref, b_fc_ref,
                        out_ref, acc_ref, *, inv_s):
    m = pl.program_id(1)

    @pl.when(m == 0)
    def _init():
        acc_ref[...] = jnp.zeros_like(acc_ref)

    # Stem conv as MXU matmul (bf16 inputs, f32 accumulation).
    feat = jnp.dot(patches_ref[0], w_inp_ref[...],
                   preferred_element_type=jnp.float32)            # (tm, 64)

    # Encoder stand-in: 1x1 conv 64 -> 2048 + ReLU (f32 accumulation).
    z = jnp.dot(feat.astype(w_enc_ref.dtype), w_enc_ref[...],
                preferred_element_type=jnp.float32)               # (tm, 2048)
    z = jnp.maximum(z, 0.0)

    # Global average pool: running spatial sum (zero-padded rows add 0).
    acc_ref[...] += jnp.sum(z, axis=0, keepdims=True)             # (1, 2048)

    @pl.when(m == pl.num_programs(1) - 1)
    def _finalize():
        pooled = acc_ref[...] * inv_s                             # (1, 2048) f32
        logits = jnp.dot(pooled, w_fc_ref[...],
                         preferred_element_type=jnp.float32)      # (1, NP)
        logits = logits + b_fc_ref[...]
        out_ref[...] = logits[None].astype(out_ref.dtype)         # (1, 1, NP)


# --------------------------------------------------------------------------
# Glue: im2col for the 7x7 / stride-2 / pad-3 stem conv (static slices, XLA).
# TODO(synk): build patches per M-tile in-kernel via manual DMA so the
# (B, S, 196) patch slab never materializes in HBM at large resolutions.
# --------------------------------------------------------------------------
def im2col_7x7_s2_p3(x_nchw):
    """x: (B, C, H, W) NCHW -> patches (B, Ho*Wo, C*7*7), flattened (c, kh, kw)."""
    B, C, H, W = x_nchw.shape
    KH = KW = 7
    ST = 2
    P = 3
    Ho = (H + 2 * P - KH) // ST + 1
    Wo = (W + 2 * P - KW) // ST + 1
    xp = jnp.pad(x_nchw, ((0, 0), (0, 0), (P, P), (P, P)))
    rows = []
    for kh in range(KH):
        cols = []
        for kw in range(KW):
            cols.append(xp[:, :, kh:kh + ST * Ho:ST, kw:kw + ST * Wo:ST])
        rows.append(jnp.stack(cols, axis=2))          # (B, C, KW, Ho, Wo)
    patches = jnp.stack(rows, axis=2)                 # (B, C, KH, KW, Ho, Wo)
    patches = jnp.transpose(patches, (0, 4, 5, 1, 2, 3))   # (B,Ho,Wo,C,KH,KW)
    return patches.reshape(B, Ho * Wo, C * KH * KW), (B, Ho, Wo)


# --------------------------------------------------------------------------
# PPNet forward
# --------------------------------------------------------------------------
def ppnet_forward(x1, mask, params, num_classes=2, max_tile_m=512):
    """x1: (B,3,H,W), mask: (B,1,H,W) -> logits (B, num_classes)."""
    x = jnp.concatenate([x1, mask], axis=1)                       # (B, 4, H, W)

    patches, (B, Ho, Wo) = im2col_7x7_s2_p3(x)                    # (B, S, 196)
    S = Ho * Wo

    # Tile spatial positions; pad S to a tile multiple and K to 256 lanes.
    tile_m = min(max_tile_m, _round_up(S, 8))
    S_pad = _round_up(S, tile_m)
    k_raw = patches.shape[-1]
    patches = jnp.pad(patches, ((0, 0), (0, S_pad - S), (0, _KP - k_raw)))
    patches = patches.astype(jnp.bfloat16)
    num_m = S_pad // tile_m

    w_inp, w_enc = params["w_inp"], params["w_enc"]
    w_fc, b_fc = params["w_fc"], params["b_fc"]

    flops = (2 * B * S_pad * _KP * _STEM_C
             + 2 * B * S_pad * _STEM_C * _ENC_C
             + 2 * B * _ENC_C * _NP)
    bytes_accessed = (patches.size * 2 + w_inp.size * 2 + w_enc.size * 2
                      + w_fc.size * 4 + b_fc.size * 4 + B * _NP * 4)

    out = pl.pallas_call(
        functools.partial(_ppnet_fused_kernel, inv_s=1.0 / S),
        out_shape=jax.ShapeDtypeStruct((B, 1, _NP), jnp.float32),
        grid=(B, num_m),
        in_specs=[
            pl.BlockSpec((1, tile_m, _KP), lambda b, m: (b, m, 0)),
            pl.BlockSpec((_KP, _STEM_C), lambda b, m: (0, 0)),
            pl.BlockSpec((_STEM_C, _ENC_C), lambda b, m: (0, 0)),
            pl.BlockSpec((_ENC_C, _NP), lambda b, m: (0, 0)),
            pl.BlockSpec((1, _NP), lambda b, m: (0, 0)),
        ],
        out_specs=pl.BlockSpec((1, 1, _NP), lambda b, m: (b, 0, 0)),
        scratch_shapes=[pltpu.VMEM((1, _ENC_C), jnp.float32)],
        compiler_params=pltpu.CompilerParams(
            dimension_semantics=("parallel", "arbitrary"),
            vmem_limit_bytes=64 * 1024 * 1024),
        cost_estimate=pl.CostEstimate(flops=flops, transcendentals=0,
                                      bytes_accessed=bytes_accessed),
    )(patches, w_inp, w_enc, w_fc, b_fc)

    return out.reshape(B, _NP)[:, :num_classes]


# --------------------------------------------------------------------------
# Deterministic parameter init + one-time layout preprocessing
# --------------------------------------------------------------------------
def init_params(key, num_classes=2):
    """Raw params in PyTorch-like layouts."""
    k1, k2, k3, k4 = jax.random.split(key, 4)
    return {
        # Conv2d(4, 64, 7, 7) weight, PyTorch layout (out, in, kh, kw)
        "w_inp": 0.05 * jax.random.normal(k1, (_STEM_C, 4, 7, 7), jnp.float32),
        # encoder stand-in 1x1 conv weight, matmul layout (in=64, out=2048)
        "w_enc": 0.05 * jax.random.normal(k2, (_STEM_C, _ENC_C), jnp.float32),
        # classify_fc: Linear(2048, num_classes), stored (in, out)
        "w_fc": 0.05 * jax.random.normal(k3, (_ENC_C, num_classes), jnp.float32),
        "b_fc": 0.05 * jax.random.normal(k4, (1, num_classes), jnp.float32),
    }


def preprocess_params(raw):
    """Hoisted one-time reshape/transpose/pad/cast work (not per-forward)."""
    w_inp = raw["w_inp"].reshape(_STEM_C, -1).T                   # (196, 64)
    w_inp = jnp.pad(w_inp, ((0, _KP - w_inp.shape[0]), (0, 0)))   # (256, 64)
    nc = raw["w_fc"].shape[1]
    w_fc = jnp.pad(raw["w_fc"], ((0, 0), (0, _NP - nc)))          # (2048, 128)
    b_fc = jnp.pad(raw["b_fc"], ((0, 0), (0, _NP - nc)))          # (1, 128)
    return {
        "w_inp": w_inp.astype(jnp.bfloat16),
        "w_enc": raw["w_enc"].astype(jnp.bfloat16),
        "w_fc": w_fc.astype(jnp.float32),
        "b_fc": b_fc.astype(jnp.float32),
    }


if __name__ == "__main__":
    key = jax.random.PRNGKey(0)
    kx, km, kp = jax.random.split(key, 3)

    B, H, W = 2, 16, 16
    num_classes = 2
    x1 = jax.random.normal(kx, (B, 3, H, W), jnp.float32)
    mask = jax.random.normal(km, (B, 1, H, W), jnp.float32)
    params = preprocess_params(init_params(kp, num_classes=num_classes))

    logits = ppnet_forward(x1, mask, params, num_classes=num_classes)
    jax.block_until_ready(logits)
    assert logits.shape == (B, num_classes)
    assert bool(jnp.all(jnp.isfinite(logits)))
    print("KERNEL_OK")
</pallas_src>

<mosaic_0001>
module attributes {stable_mosaic.version = 11 : i64} {
  func.func @_ppnet_fused_kernel(%arg0: i32, %arg1: i32, %arg2: memref<1x64x256xbf16, #tpu.memory_space<vmem>>, %arg3: memref<256x64xbf16, #tpu.memory_space<vmem>>, %arg4: memref<64x2048xbf16, #tpu.memory_space<vmem>>, %arg5: memref<2048x128xf32, #tpu.memory_space<vmem>>, %arg6: memref<1x128xf32, #tpu.memory_space<vmem>>, %arg7: memref<1x1x128xf32, #tpu.memory_space<vmem>>, %arg8: memref<1x2048xf32, #tpu.memory_space<vmem>>) attributes {dimension_semantics = [#tpu.dimension_semantics<parallel>, #tpu.dimension_semantics<arbitrary>], iteration_bounds = array<i64: 2, 1>, scalar_prefetch = 0 : i64, scratch_operands = 1 : i64, tpu.core_type = #tpu.core_type<tc>, window_params = [{transform_indices = @transform_0, window_bounds = array<i64: 1, 64, 256>}, {pipeline_mode = #tpu.pipeline_mode<synchronous>, transform_indices = @transform_1, window_bounds = array<i64: 256, 64>}, {pipeline_mode = #tpu.pipeline_mode<synchronous>, transform_indices = @transform_2, window_bounds = array<i64: 64, 2048>}, {pipeline_mode = #tpu.pipeline_mode<synchronous>, transform_indices = @transform_3, window_bounds = array<i64: 2048, 128>}, {pipeline_mode = #tpu.pipeline_mode<synchronous>, transform_indices = @transform_4, window_bounds = array<i64: 1, 128>}, {transform_indices = @transform_5, window_bounds = array<i64: 1, 1, 128>}]} {
    %c0_i32 = arith.constant 0 : i32
    %0 = arith.cmpi eq, %arg1, %c0_i32 : i32
    %1 = arith.extui %0 : i1 to i32
    %c0_i32_0 = arith.constant 0 : i32
    %2 = arith.cmpi ne, %1, %c0_i32_0 : i32
    scf.if %2 {
      %cst_16 = arith.constant 0.000000e+00 : f32
      %20 = vector.broadcast %cst_16 : f32 to vector<1x2048xf32>
      %c0_17 = arith.constant 0 : index
      %c0_18 = arith.constant 0 : index
      %21 = vector.load %arg8[%c0_17, %c0_18] : memref<1x2048xf32, #tpu.memory_space<vmem>>, vector<1x2048xf32>
      tpu.vector_store %arg8[%c0_17, %c0_18], %20 {strides = array<i32>} : memref<1x2048xf32, #tpu.memory_space<vmem>>, vector<1x2048xf32>,
    } else {
    }
    %c0 = arith.constant 0 : index
    %c0_1 = arith.constant 0 : index
    %c0_2 = arith.constant 0 : index
    %3 = vector.load %arg2[%c0, %c0_1, %c0_2] : memref<1x64x256xbf16, #tpu.memory_space<vmem>>, vector<1x64x256xbf16>
    %4 = vector.shape_cast %3 : vector<1x64x256xbf16> to vector<64x256xbf16>
    %c0_3 = arith.constant 0 : index
    %c0_4 = arith.constant 0 : index
    %5 = vector.load %arg3[%c0_3, %c0_4] : memref<256x64xbf16, #tpu.memory_space<vmem>>, vector<256x64xbf16>
    %cst = arith.constant dense<0.000000e+00> : vector<64x64xf32>
    %6 = tpu.matmul %4, %5, %cst {dimension_numbers = #tpu.dot_dimension_numbers<[1], [0], [0], [1], [0, 0, 1, 1], [], []>} : vector<64x256xbf16>, vector<256x64xbf16>, vector<64x64xf32> -> vector<64x64xf32>
    %7 = arith.truncf %6 : vector<64x64xf32> to vector<64x64xbf16>
    %c0_5 = arith.constant 0 : index
    %c0_6 = arith.constant 0 : index
    %8 = vector.load %arg4[%c0_5, %c0_6] : memref<64x2048xbf16, #tpu.memory_space<vmem>>, vector<64x2048xbf16>
    %cst_7 = arith.constant dense<0.000000e+00> : vector<64x2048xf32>
    %9 = tpu.matmul %7, %8, %cst_7 {dimension_numbers = #tpu.dot_dimension_numbers<[1], [0], [0], [1], [0, 0, 1, 1], [], []>} : vector<64x64xbf16>, vector<64x2048xbf16>, vector<64x2048xf32> -> vector<64x2048xf32>
    %cst_8 = arith.constant 0.000000e+00 : f32
    %10 = vector.broadcast %cst_8 : f32 to vector<64x2048xf32>
    %11 = arith.maximumf %9, %10 : vector<64x2048xf32>
    %c0_9 = arith.constant 0 : index
    %c0_10 = arith.constant 0 : index
    %12 = vector.load %arg8[%c0_9, %c0_10] : memref<1x2048xf32, #tpu.memory_space<vmem>>, vector<1x2048xf32>
    %cst_11 = arith.constant dense<0.000000e+00> : vector<2048xf32>
    %13 = vector.multi_reduction <add>, %11, %cst_11 [0] : vector<64x2048xf32> to vector<2048xf32>
    %14 = vector.shape_cast %13 : vector<2048xf32> to vector<1x2048xf32>
    %15 = arith.addf %12, %14 : vector<1x2048xf32>
    %c0_12 = arith.constant 0 : index
    %c0_13 = arith.constant 0 : index
    %16 = vector.load %arg8[%c0_12, %c0_13] : memref<1x2048xf32, #tpu.memory_space<vmem>>, vector<1x2048xf32>
    tpu.vector_store %arg8[%c0_12, %c0_13], %15 {strides = array<i32>} : memref<1x2048xf32, #tpu.memory_space<vmem>>, vector<1x2048xf32>,
    %c0_i32_14 = arith.constant 0 : i32
    %17 = arith.cmpi eq, %arg1, %c0_i32_14 : i32
    %18 = arith.extui %17 : i1 to i32
    %c0_i32_15 = arith.constant 0 : i32
    %19 = arith.cmpi ne, %18, %c0_i32_15 : i32
    scf.if %19 {
      %c0_16 = arith.constant 0 : index
      %c0_17 = arith.constant 0 : index
      %20 = vector.load %arg8[%c0_16, %c0_17] : memref<1x2048xf32, #tpu.memory_space<vmem>>, vector<1x2048xf32>
      %cst_18 = arith.constant 1.562500e-02 : f32
      %21 = vector.broadcast %cst_18 : f32 to vector<1x2048xf32>
      %22 = arith.mulf %20, %21 : vector<1x2048xf32>
      %c0_19 = arith.constant 0 : index
      %c0_20 = arith.constant 0 : index
      %23 = vector.load %arg5[%c0_19, %c0_20] : memref<2048x128xf32, #tpu.memory_space<vmem>>, vector<2048x128xf32>
      %cst_21 = arith.constant dense<0.000000e+00> : vector<1x128xf32>
      %24 = tpu.matmul %22, %23, %cst_21 {dimension_numbers = #tpu.dot_dimension_numbers<[1], [0], [0], [1], [0, 0, 1, 1], [], []>} : vector<1x2048xf32>, vector<2048x128xf32>, vector<1x128xf32> -> vector<1x128xf32>
      %c0_22 = arith.constant 0 : index
      %c0_23 = arith.constant 0 : index
      %25 = vector.load %arg6[%c0_22, %c0_23] : memref<1x128xf32, #tpu.memory_space<vmem>>, vector<1x128xf32>
      %26 = arith.addf %24, %25 : vector<1x128xf32>
      %27 = vector.shape_cast %26 : vector<1x128xf32> to vector<1x1x128xf32>
      %c0_24 = arith.constant 0 : index
      %c0_25 = arith.constant 0 : index
      %c0_26 = arith.constant 0 : index
      %28 = vector.load %arg7[%c0_24, %c0_25, %c0_26] : memref<1x1x128xf32, #tpu.memory_space<vmem>>, vector<1x1x128xf32>
      tpu.vector_store %arg7[%c0_24, %c0_25, %c0_26], %27 {strides = array<i32>} : memref<1x1x128xf32, #tpu.memory_space<vmem>>, vector<1x1x128xf32>,
    } else {
    }
    return
  }
  func.func @transform_0(%arg0: i32, %arg1: i32) -> (i32, i32, i32) {
    %c0_i32 = arith.constant 0 : i32
    %c0_i32_0 = arith.constant 0 : i32
    return %arg0, %arg1, %c0_i32 : i32, i32, i32
  }
  func.func @transform_1(%arg0: i32, %arg1: i32) -> (i32, i32) {
    %c0_i32 = arith.constant 0 : i32
    %c0_i32_0 = arith.constant 0 : i32
    %c0_i32_1 = arith.constant 0 : i32
    return %c0_i32, %c0_i32_0 : i32, i32
  }
  func.func @transform_2(%arg0: i32, %arg1: i32) -> (i32, i32) {
    %c0_i32 = arith.constant 0 : i32
    %c0_i32_0 = arith.constant 0 : i32
    %c0_i32_1 = arith.constant 0 : i32
    return %c0_i32, %c0_i32_0 : i32, i32
  }
  func.func @transform_3(%arg0: i32, %arg1: i32) -> (i32, i32) {
    %c0_i32 = arith.constant 0 : i32
    %c0_i32_0 = arith.constant 0 : i32
    %c0_i32_1 = arith.constant 0 : i32
    return %c0_i32, %c0_i32_0 : i32, i32
  }
  func.func @transform_4(%arg0: i32, %arg1: i32) -> (i32, i32) {
    %c0_i32 = arith.constant 0 : i32
    %c0_i32_0 = arith.constant 0 : i32
    %c0_i32_1 = arith.constant 0 : i32
    return %c0_i32, %c0_i32_0 : i32, i32
  }
  func.func @transform_5(%arg0: i32, %arg1: i32) -> (i32, i32, i32) {
    %c0_i32 = arith.constant 0 : i32
    %c0_i32_0 = arith.constant 0 : i32
    %c0_i32_1 = arith.constant 0 : i32
    return %arg0, %c0_i32, %c0_i32_0 : i32, i32, i32
  }
}

</mosaic_0001>

<llo_original>
// kernel: tpu_custom_call.1
$region0: #{tpu_custom_call.1}
  #allocation0 [shape = 'u32[]', space=smem, size = 0x4, offset = 0x4, fixed_abs, tag = 'smem constant byte address 0x4 - core index']
  #allocation1 [shape = 'u32[144,128]{1,0:T(1,128)}', space=vmem, size = 0x12000, scoped, tag = 'internal scratch']
  #allocation2 [shape = 'f32[1,2048]{1,0:T(1,128)}', space=vmem, size = 0x2000, scoped, tag = 'scratch operand']
  %s0 = inlined_call_operand.hbm [shape: bf16[2,64,256], index: 0, kind: input, shape index: {}]
  %s1 = inlined_call_operand.hbm [shape: bf16[256,64], index: 1, kind: input, shape index: {}]
  %s2 = inlined_call_operand.hbm [shape: bf16[64,2048], index: 2, kind: input, shape index: {}]
  %s3 = inlined_call_operand.hbm [shape: f32[2048,128], index: 3, kind: input, shape index: {}]
  %s4 = inlined_call_operand.hbm [shape: f32[1,128], index: 4, kind: input, shape index: {}]
  %s5 = inlined_call_operand.hbm [shape: f32[2,1,128], index: 5, kind: output, shape index: {}]
  %s6 = sld [smem:[#allocation0]]
  $region81: #{tpu_custom_call.1} parent=0
    _
  %s8 = ssub.s32 1, %s6
  %s9 = scalar_select 0, %s8, %s6
  $region1: #{tpu_custom_call.1} parent=0
    #allocation3 [shape = 'u8[65536]{0}', space=vmem, size = 0x10000, scoped, tag = 'input window, operand 0']
    #allocation4 [shape = 's32[2]{0}', space=sflag, size = 0x8, scoped, tag = 'scoped memory for tpu_custom_call.1']
    #allocation5 [shape = 's32[2]{0}', space=sflag, size = 0x8, scoped, tag = 'scoped memory for tpu_custom_call.1']
    #allocation6 [shape = 'u8[65536]{0}', space=vmem, size = 0x10000, scoped, tag = 'input window, operand 1, single buffered']
    #allocation7 [shape = 's32[1]{0}', space=sflag, size = 0x4, scoped, tag = 'scoped memory for tpu_custom_call.1']
    #allocation8 [shape = 'u8[262144]{0}', space=vmem, size = 0x40000, scoped, tag = 'input window, operand 2, single buffered']
    #allocation9 [shape = 'u8[1048576]{0}', space=vmem, size = 0x100000, scoped, tag = 'input window, operand 3, single buffered']
    #allocation10 [shape = 's32[1]{0}', space=sflag, size = 0x4, scoped, tag = 'scoped memory for tpu_custom_call.1']
    #allocation11 [shape = 'u8[512]{0}', space=vmem, size = 0x400, scoped, tag = 'input window, operand 4, single buffered']
    #allocation12 [shape = 'u8[1024]{0}', space=vmem, size = 0x400, scoped, tag = 'output window, operand 0']
    %10 = vsyncpa [#allocation4], 0
    %s11 = scalar_lea.sflag [#allocation4], 1
    %12 = vsyncpa %s11, 0
    %13 = vsyncpa [#allocation7], 0
    %14 = vsyncpa [#allocation10], 0
    %15 = vsyncpa [#allocation5], 0
    %s16 = scalar_lea.sflag [#allocation5], 1
    %17 = vsyncpa %s16, 0
    loop: start=0, step=1, limit=4
    $region2: #{tpu_custom_call.1} parent=1 // loop_pre_header
      _
    $region3: #{tpu_custom_call.1} parent=1 // loop_header
      %s19 = sphi 0, %s23
      %p20 = scmp.ge.s32.totalorder %s19, 4
      %s26 = sphi 0, %s38
      %s27 = sphi 0, %s34
      %s28 = sphi 0, %s26
      %s29 = sphi 0, %s27
      %s30 = sphi 0, %s28
      %s31 = sphi 0, %s29
      %s43 = sphi 0, %s45
      %s46 = sphi 0, %s43
      %s47 = sphi 0, %s46
      %s63 = sphi 0, %s47
      %s67 = sphi 0, %s67
      %s69 = sphi 0, %s67
      %s70 = sphi 0, %s69
      %s84 = sphi 0, %s70
      %s88 = sphi 0, %s88
      %s90 = sphi 0, %s88
      %s91 = sphi 0, %s90
      %s105 = sphi 0, %s91
      %s109 = sphi 0, %s109
      %s111 = sphi 0, %s109
      %s112 = sphi 0, %s111
      %s126 = sphi 0, %s112
      %s130 = sphi 0, %s130
      %s132 = sphi 0, %s130
      %s133 = sphi 0, %s132
      %s147 = sphi 0, %s133
      %s153 = sphi 0, %s155
      %s156 = sphi 0, %s153
      %s157 = sphi 0, %s156
      %s173 = sphi 0, %s157
    $region4: #{tpu_custom_call.1} parent=1 // loop_header_branch
      %22 = sbr.rel (%p20) target = $region8
    $region5: #{tpu_custom_call.1} parent=1 // loop_body
      %s24 = ssub.s32 %s19, 1
      %s25 = ssub.s32 %s19, 2
      %s32 = sadd.s32 1, %s27
      %p33 = scmp.ge.s32.totalorder %s32, 1
      %s34 = scalar_select %p33, 0, %s32
      %s35 = sadd.s32 1, %s26
      %s36 = scalar_select %p33, %s35, %s26
      %p37 = scmp.ge.s32.totalorder %s36, 2
      %s38 = scalar_select %p37, 0, %s36
      %s39 = ssub.s32 %s26, %s38
      %s40 = ssub.s32 %s27, %s34
      %s41 = sor.u32 %s39, %s40
      %p42 = scmp.eq.s32.totalorder %s41, 0
      %s44 = sadd.s32 %s43, 1
      %s45 = scalar_select %p42, %s43, %s44
      %p48 = pneg %p42
      %p49 = scmp.eq.s32.totalorder %s19, 1
      %p50 = por %p48, %p49
      %p51 = scmp.ne.s32.totalorder %s43, %s46
      %p52 = scmp.eq.s32.totalorder %s19, 0
      %p53 = por %p51, %p52
      %p54 = scmp.ne.s32.totalorder %s43, %s46
      %p55 = scmp.eq.s32.totalorder %s24, 1
      %p56 = por %p54, %p55
      %p57 = scmp.ne.s32.totalorder %s46, %s47
      %p58 = scmp.eq.s32.totalorder %s24, 0
      %p59 = por %p57, %p58
      %p60 = scmp.ne.s32.totalorder %s46, %s47
      %p61 = scmp.eq.s32.totalorder %s25, 1
      %p62 = por %p60, %p61
      %p64 = scmp.ne.s32.totalorder %s47, %s63
      %p65 = scmp.eq.s32.totalorder %s25, 0
      %p66 = por %p64, %p65
      %s68 = sadd.s32 %s67, 1
      %p71 = scmp.eq.s32.totalorder %s19, 1
      %p72 = scmp.ne.s32.totalorder %s67, %s69
      %p73 = scmp.eq.s32.totalorder %s19, 0
      %p74 = por %p72, %p73
      %p75 = scmp.ne.s32.totalorder %s67, %s69
      %p76 = scmp.eq.s32.totalorder %s24, 1
      %p77 = por %p75, %p76
      %p78 = scmp.ne.s32.totalorder %s69, %s70
      %p79 = scmp.eq.s32.totalorder %s24, 0
      %p80 = por %p78, %p79
      %p81 = scmp.ne.s32.totalorder %s69, %s70
      %p82 = scmp.eq.s32.totalorder %s25, 1
      %p83 = por %p81, %p82
      %p85 = scmp.ne.s32.totalorder %s70, %s84
      %p86 = scmp.eq.s32.totalorder %s25, 0
      %p87 = por %p85, %p86
      %s89 = sadd.s32 %s88, 1
      %p92 = scmp.eq.s32.totalorder %s19, 1
      %p93 = scmp.ne.s32.totalorder %s88, %s90
      %p94 = scmp.eq.s32.totalorder %s19, 0
      %p95 = por %p93, %p94
      %p96 = scmp.ne.s32.totalorder %s88, %s90
      %p97 = scmp.eq.s32.totalorder %s24, 1
      %p98 = por %p96, %p97
      %p99 = scmp.ne.s32.totalorder %s90, %s91
      %p100 = scmp.eq.s32.totalorder %s24, 0
      %p101 = por %p99, %p100
      %p102 = scmp.ne.s32.totalorder %s90, %s91
      %p103 = scmp.eq.s32.totalorder %s25, 1
      %p104 = por %p102, %p103
      %p106 = scmp.ne.s32.totalorder %s91, %s105
      %p107 = scmp.eq.s32.totalorder %s25, 0
      %p108 = por %p106, %p107
      %s110 = sadd.s32 %s109, 1
      %p113 = scmp.eq.s32.totalorder %s19, 1
      %p114 = scmp.ne.s32.totalorder %s109, %s111
      %p115 = scmp.eq.s32.totalorder %s19, 0
      %p116 = por %p114, %p115
      %p117 = scmp.ne.s32.totalorder %s109, %s111
      %p118 = scmp.eq.s32.totalorder %s24, 1
      %p119 = por %p117, %p118
      %p120 = scmp.ne.s32.totalorder %s111, %s112
      %p121 = scmp.eq.s32.totalorder %s24, 0
      %p122 = por %p120, %p121
      %p123 = scmp.ne.s32.totalorder %s111, %s112
      %p124 = scmp.eq.s32.totalorder %s25, 1
      %p125 = por %p123, %p124
      %p127 = scmp.ne.s32.totalorder %s112, %s126
      %p128 = scmp.eq.s32.totalorder %s25, 0
      %p129 = por %p127, %p128
      %s131 = sadd.s32 %s130, 1
      %p134 = scmp.eq.s32.totalorder %s19, 1
      %p135 = scmp.ne.s32.totalorder %s130, %s132
      %p136 = scmp.eq.s32.totalorder %s19, 0
      %p137 = por %p135, %p136
      %p138 = scmp.ne.s32.totalorder %s130, %s132
      %p139 = scmp.eq.s32.totalorder %s24, 1
      %p140 = por %p138, %p139
      %p141 = scmp.ne.s32.totalorder %s132, %s133
      %p142 = scmp.eq.s32.totalorder %s24, 0
      %p143 = por %p141, %p142
      %p144 = scmp.ne.s32.totalorder %s132, %s133
      %p145 = scmp.eq.s32.totalorder %s25, 1
      %p146 = por %p144, %p145
      %p148 = scmp.ne.s32.totalorder %s133, %s147
      %p149 = scmp.eq.s32.totalorder %s25, 0
      %p150 = por %p148, %p149
      %s151 = ssub.s32 %s26, %s38
      %p152 = scmp.eq.s32.totalorder %s151, 0
      %s154 = sadd.s32 %s153, 1
      %s155 = scalar_select %p152, %s153, %s154
      %p158 = pneg %p152
      %p159 = scmp.eq.s32.totalorder %s19, 1
      %p160 = por %p158, %p159
      %p161 = scmp.ne.s32.totalorder %s153, %s156
      %p162 = scmp.eq.s32.totalorder %s19, 0
      %p163 = por %p161, %p162
      %p164 = scmp.ne.s32.totalorder %s153, %s156
      %p165 = scmp.eq.s32.totalorder %s24, 1
      %p166 = por %p164, %p165
      %p167 = scmp.ne.s32.totalorder %s156, %s157
      %p168 = scmp.eq.s32.totalorder %s24, 0
      %p169 = por %p167, %p168
      %p170 = scmp.ne.s32.totalorder %s156, %s157
      %p171 = scmp.eq.s32.totalorder %s25, 1
      %p172 = por %p170, %p171
      %p174 = scmp.ne.s32.totalorder %s157, %s173
      %p175 = scmp.eq.s32.totalorder %s25, 0
      %p176 = por %p174, %p175
      %p177 = scmp.le.s32.totalorder 1, %s19
      %p178 = scmp.lt.s32.totalorder %s19, 3
      %p179 = pnand %p177, %p178
      %p180 = pneg %p179
      // Predicated region
      $region9: #{tpu_custom_call.1} parent=5 // pred_check
        _
      $region10: #{tpu_custom_call.1} parent=5 // pred_check_branch
        %182 = sbr.rel (%p179) target = $region12
      $region11: #{tpu_custom_call.1} parent=5 // pred_region
        %s183 = ssub.s32 %s19, 1
        // Predicated region
        $region13: #{tpu_custom_call.1} parent=11 // pred_check
          %p184 = pneg %p80
        $region14: #{tpu_custom_call.1} parent=11 // pred_check_branch
          %186 = sbr.rel (%p184) target = $region16
        $region15: #{tpu_custom_call.1} parent=11 // pred_region
          %s188 = ssub.s32 2048, 2048
          %189 = vsyncadd [#allocation7], %s188
          %s190 = sshll.u32 [#allocation6], 4
          %s191 = int_to_ptr.vmem [resolvable:$true] %s190
          %196 = dma.hbm_to_vmem [thread:$0]  %s1, 2048, %s191, [#allocation7], 64, 64, 4
        $region16: #{tpu_custom_call.1} parent=11 // pred_fallthru
          _
        // Predicated region
        $region17: #{tpu_custom_call.1} parent=11 // pred_check
          %p197 = pneg %p101
        $region18: #{tpu_custom_call.1} parent=11 // pred_check_branch
          %199 = sbr.rel (%p197) target = $region20
        $region19: #{tpu_custom_call.1} parent=11 // pred_region
          %s201 = ssub.s32 8192, 8192
          %202 = vsyncadd [#allocation7], %s201
          %s203 = sshll.u32 [#allocation8], 4
          %s204 = int_to_ptr.vmem [resolvable:$true] %s203
          %209 = dma.hbm_to_vmem [thread:$0]  %s2, 8192, %s204, [#allocation7], 1024, 1024, 64
        $region20: #{tpu_custom_call.1} parent=11 // pred_fallthru
          _
        // Predicated region
        $region21: #{tpu_custom_call.1} parent=11 // pred_check
          %p210 = pneg %p122
        $region22: #{tpu_custom_call.1} parent=11 // pred_check_branch
          %212 = sbr.rel (%p210) target = $region24
        $region23: #{tpu_custom_call.1} parent=11 // pred_region
          %s214 = ssub.s32 32768, 32768
          %215 = vsyncadd [#allocation10], %s214
          %s216 = sshll.u32 [#allocation9], 4
          %s217 = int_to_ptr.vmem [resolvable:$true] %s216
          %222 = dma.hbm_to_vmem [thread:$0]  %s3, 32768, %s217, [#allocation10], 128, 128, 8
        $region24: #{tpu_custom_call.1} parent=11 // pred_fallthru
          _
        // Predicated region
        $region25: #{tpu_custom_call.1} parent=11 // pred_check
          %p223 = pneg %p143
        $region26: #{tpu_custom_call.1} parent=11 // pred_check_branch
          %225 = sbr.rel (%p223) target = $region28
        $region27: #{tpu_custom_call.1} parent=11 // pred_region
          %s227 = ssub.s32 16, 16
          %228 = vsyncadd [#allocation10], %s227
          %s230 = sshll.u32 [#allocation11], 4
          %s231 = int_to_ptr.vmem [resolvable:$true] %s230
          %233 = dma.hbm_to_vmem [thread:$0]  %s4, 16, %s231, [#allocation10]
        $region28: #{tpu_custom_call.1} parent=11 // pred_fallthru
          _
      $region12: #{tpu_custom_call.1} parent=5 // pred_fallthru
        _
      %p234 = scmp.lt.s32.totalorder %s19, 2
      // Predicated region
      $region29: #{tpu_custom_call.1} parent=5 // pred_check
        %p235 = pneg %p234
      $region30: #{tpu_custom_call.1} parent=5 // pred_check_branch
        %237 = sbr.rel (%p235) target = $region32
      $region31: #{tpu_custom_call.1} parent=5 // pred_region
        // Predicated region
        $region33: #{tpu_custom_call.1} parent=31 // pred_check
          %p238 = pneg %p53
        $region34: #{tpu_custom_call.1} parent=31 // pred_check_branch
          %240 = sbr.rel (%p238) target = $region36
        $region35: #{tpu_custom_call.1} parent=31 // pred_region
          %s241 = sand.u32 %s43, 1
          %s242 = scalar_lea.sflag [#allocation4], %s241
          %s243 = sand.u32 %s43, 1
          %s244 = smul.addr %s243, 64
          %s245 = scalar_lea.vmem [#allocation3], %s244
          %s246 = smul.u32 8, %s27
          %s248 = ssub.s32 1024, 1024
          %249 = vsyncadd %s242, %s248
          %s250 = smul.addr %s246, 2
          %s251 = smul.addr %s26, 16
          %s252 = sadd.s32 %s250, %s251
          %s253 = smul.addr %s252, 64
          %s254 = scalar_lea.hbm %s0, %s253
          %s255 = sshll.u32 %s245, 4
          %s256 = int_to_ptr.vmem [resolvable:$true] %s255
          %261 = dma.hbm_to_vmem [thread:$0]  %s254, 1024, %s256, %s242, 128, 128, 8
        $region36: #{tpu_custom_call.1} parent=31 // pred_fallthru
          _
      $region32: #{tpu_custom_call.1} parent=5 // pred_fallthru
        _
      %p262 = scmp.le.s32.totalorder 1, %s19
      %p263 = scmp.lt.s32.totalorder %s19, 3
      %p264 = pnand %p262, %p263
      %p265 = pneg %p264
      // Predicated region
      $region37: #{tpu_custom_call.1} parent=5 // pred_check
        _
      $region38: #{tpu_custom_call.1} parent=5 // pred_check_branch
        %267 = sbr.rel (%p264) target = $region40
      $region39: #{tpu_custom_call.1} parent=5 // pred_region
        %s268 = ssub.s32 %s19, 1
        %s269 = sand.u32 %s46, 1
        %s270 = scalar_lea.sflag [#allocation4], %s269
        %s271 = sand.u32 %s46, 1
        %s272 = smul.addr %s271, 64
        %s273 = scalar_lea.vmem [#allocation3], %s272
        // Predicated region
        $region41: #{tpu_custom_call.1} parent=39 // pred_check
          %p274 = pneg %p59
        $region42: #{tpu_custom_call.1} parent=39 // pred_check_branch
          %276 = sbr.rel (%p274) target = $region44
        $region43: #{tpu_custom_call.1} parent=39 // pred_region
          %277 = dma.done %s270, 1024
        $region44: #{tpu_custom_call.1} parent=39 // pred_fallthru
          _
        // Predicated region
        $region45: #{tpu_custom_call.1} parent=39 // pred_check
          %p278 = pneg %p80
        $region46: #{tpu_custom_call.1} parent=39 // pred_check_branch
          %280 = sbr.rel (%p278) target = $region48
        $region47: #{tpu_custom_call.1} parent=39 // pred_region
          %281 = dma.done [#allocation7], 2048
        $region48: #{tpu_custom_call.1} parent=39 // pred_fallthru
          _
        // Predicated region
        $region49: #{tpu_custom_call.1} parent=39 // pred_check
          %p282 = pneg %p101
        $region50: #{tpu_custom_call.1} parent=39 // pred_check_branch
          %284 = sbr.rel (%p282) target = $region52
        $region51: #{tpu_custom_call.1} parent=39 // pred_region
          %285 = dma.done [#allocation7], 8192
        $region52: #{tpu_custom_call.1} parent=39 // pred_fallthru
          _
        // Predicated region
        $region53: #{tpu_custom_call.1} parent=39 // pred_check
          %p286 = pneg %p122
        $region54: #{tpu_custom_call.1} parent=39 // pred_check_branch
          %288 = sbr.rel (%p286) target = $region56
        $region55: #{tpu_custom_call.1} parent=39 // pred_region
          %289 = dma.done [#allocation10], 32768
        $region56: #{tpu_custom_call.1} parent=39 // pred_fallthru
          _
        // Predicated region
        $region57: #{tpu_custom_call.1} parent=39 // pred_check
          %p290 = pneg %p143
        $region58: #{tpu_custom_call.1} parent=39 // pred_check_branch
          %292 = sbr.rel (%p290) target = $region60
        $region59: #{tpu_custom_call.1} parent=39 // pred_region
          %293 = dma.done [#allocation10], 16
        $region60: #{tpu_custom_call.1} parent=39 // pred_fallthru
          _
        %s294 = sand.u32 %s46, 1
        %s295 = scalar_lea.sflag [#allocation4], %s294
        %s296 = sand.u32 %s46, 1
        %s297 = smul.addr %s296, 64
        %s298 = scalar_lea.vmem [#allocation3], %s297
        %p299 = pneg %p59
        %p300 = pneg %p56
        %p301 = pneg %p80
        %p302 = pneg %p77
        %p303 = pneg %p101
        %p304 = pneg %p98
        %p305 = pneg %p122
        %p306 = pneg %p119
        %p307 = pneg %p143
        %p308 = pneg %p140
        %p309 = pneg %p169
        %p310 = pneg %p166
        %s311 = sand.u32 %s156, 1
        %s312 = scalar_lea.sflag [#allocation5], %s311
        %s313 = sand.u32 %s156, 1
        %s314 = scalar_lea.vmem [#allocation12], %s313
        %s315 = smul.u32 8, %s29
        %p317 = scmp.eq.s32.totalorder %s29, 0
        // Predicated region
        $region61: #{tpu_custom_call.1} parent=39 // pred_check
          %p318 = pneg %p317
        $region62: #{tpu_custom_call.1} parent=39 // pred_check_branch
          %320 = sbr.rel (%p318) target = $region64
        $region63: #{tpu_custom_call.1} parent=39 // pred_region
          %321 = vst [vmem:[#allocation2] sm:$0xff] 0.0
          %322 = vst [vmem:[#allocation2 + $0x8] sm:$0xff] 0.0
        $region64: #{tpu_custom_call.1} parent=39 // pred_fallthru
          _
        %v323 = vld [vmem:[%s273] sm:$0xff]
        %v324 = vld [vmem:[%s273 + $0x8] sm:$0xff]
        %v325 = vld [vmem:[%s273 + $0x10] sm:$0xff]
        %v326 = vld [vmem:[%s273 + $0x18] sm:$0xff]
        %v327 = vld [vmem:[%s273 + $0x20] sm:$0xff]
        %v328 = vld [vmem:[%s273 + $0x28] sm:$0xff]
        %v329 = vld [vmem:[%s273 + $0x30] sm:$0xff]
        %v330 = vld [vmem:[%s273 + $0x38] sm:$0xff]
        %v331 = vld [vmem:[#allocation6] sm:$0xf]
        %v332 = vld [vmem:[#allocation6 + $0x4] sm:$0xf]
        %v333 = vld [vmem:[#allocation6 + $0x8] sm:$0xf]
        %v334 = vld [vmem:[#allocation6 + $0xc] sm:$0xf]
        %v335 = vld [vmem:[#allocation6 + $0x10] sm:$0xf]
        %v336 = vld [vmem:[#allocation6 + $0x14] sm:$0xf]
        %v337 = vld [vmem:[#allocation6 + $0x18] sm:$0xf]
        %v338 = vld [vmem:[#allocation6 + $0x1c] sm:$0xf]
        %v339 = vld [vmem:[#allocation6 + $0x20] sm:$0xf]
        %v340 = vld [vmem:[#allocation6 + $0x24] sm:$0xf]
        %v341 = vld [vmem:[#allocation6 + $0x28] sm:$0xf]
        %v342 = vld [vmem:[#allocation6 + $0x2c] sm:$0xf]
        %v343 = vld [vmem:[#allocation6 + $0x30] sm:$0xf]
        %v344 = vld [vmem:[#allocation6 + $0x34] sm:$0xf]
        %v345 = vld [vmem:[#allocation6 + $0x38] sm:$0xf]
        %v346 = vld [vmem:[#allocation6 + $0x3c] sm:$0xf]
        %v347 = vld [vmem:[#allocation6 + $0x40] sm:$0xf]
        %v348 = vld [vmem:[#allocation6 + $0x44] sm:$0xf]
        %v349 = vld [vmem:[#allocation6 + $0x48] sm:$0xf]
        %v350 = vld [vmem:[#allocation6 + $0x4c] sm:$0xf]
        %v351 = vld [vmem:[#allocation6 + $0x50] sm:$0xf]
        %v352 = vld [vmem:[#allocation6 + $0x54] sm:$0xf]
        %v353 = vld [vmem:[#allocation6 + $0x58] sm:$0xf]
        %v354 = vld [vmem:[#allocation6 + $0x5c] sm:$0xf]
        %v355 = vld [vmem:[#allocation6 + $0x60] sm:$0xf]
        %v356 = vld [vmem:[#allocation6 + $0x64] sm:$0xf]
        %v357 = vld [vmem:[#allocation6 + $0x68] sm:$0xf]
        %v358 = vld [vmem:[#allocation6 + $0x6c] sm:$0xf]
        %v359 = vld [vmem:[#allocation6 + $0x70] sm:$0xf]
        %v360 = vld [vmem:[#allocation6 + $0x74] sm:$0xf]
        %v361 = vld [vmem:[#allocation6 + $0x78] sm:$0xf]
        %v362 = vld [vmem:[#allocation6 + $0x7c] sm:$0xf]
        %v371 = vunpack.c.l.b16 %v323
        %v372 = vunpack.c.h.b16 %v323
        %v373 = vunpack.c.l.b16 %v324
        %v374 = vunpack.c.h.b16 %v324
        %v375 = vunpack.c.l.b16 %v325
        %v376 = vunpack.c.h.b16 %v325
        %v377 = vunpack.c.l.b16 %v326
        %v378 = vunpack.c.h.b16 %v326
        %v379 = vunpack.c.l.b16 %v327
        %v380 = vunpack.c.h.b16 %v327
        %v381 = vunpack.c.l.b16 %v328
        %v382 = vunpack.c.h.b16 %v328
        %v383 = vunpack.c.l.b16 %v329
        %v384 = vunpack.c.h.b16 %v329
        %v385 = vunpack.c.l.b16 %v330
        %v386 = vunpack.c.h.b16 %v330
        %v387 = vpack.c.b16 %v373, %v371
        %v388 = vpack.c.b16 %v374, %v372
        %v389 = vpack.c.b16 %v377, %v375
        %v390 = vpack.c.b16 %v378, %v376
        %v391 = vpack.c.b16 %v381, %v379
        %v392 = vpack.c.b16 %v382, %v380
        %v393 = vpack.c.b16 %v385, %v383
        %v394 = vpack.c.b16 %v386, %v384
        %v435 = vunpack.c.l.b16 %v331
        %v436 = vunpack.c.l.b16 %v332
        %v437 = vunpack.c.l.b16 %v333
        %v438 = vunpack.c.l.b16 %v334
        %v439 = vunpack.c.l.b16 %v335
        %v440 = vunpack.c.l.b16 %v336
        %v441 = vunpack.c.l.b16 %v337
        %v442 = vunpack.c.l.b16 %v338
        %v443 = vunpack.c.l.b16 %v339
        %v444 = vunpack.c.l.b16 %v340
        %v445 = vunpack.c.l.b16 %v341
        %v446 = vunpack.c.l.b16 %v342
        %v447 = vunpack.c.l.b16 %v343
        %v448 = vunpack.c.l.b16 %v344
        %v449 = vunpack.c.l.b16 %v345
        %v450 = vunpack.c.l.b16 %v346
        %v451 = vunpack.c.l.b16 %v347
        %v452 = vunpack.c.l.b16 %v348
        %v453 = vunpack.c.l.b16 %v349
        %v454 = vunpack.c.l.b16 %v350
        %v455 = vunpack.c.l.b16 %v351
        %v456 = vunpack.c.l.b16 %v352
        %v457 = vunpack.c.l.b16 %v353
        %v458 = vunpack.c.l.b16 %v354
        %v459 = vunpack.c.l.b16 %v355
        %v460 = vunpack.c.l.b16 %v356
        %v461 = vunpack.c.l.b16 %v357
        %v462 = vunpack.c.l.b16 %v358
        %v463 = vunpack.c.l.b16 %v359
        %v464 = vunpack.c.l.b16 %v360
        %v465 = vunpack.c.l.b16 %v361
        %v466 = vunpack.c.l.b16 %v362
        %v467 = vpack.c.b16 %v436, %v435
        %v468 = vpack.c.b16 %v438, %v437
        %v469 = vpack.c.b16 %v440, %v439
        %v470 = vpack.c.b16 %v442, %v441
        %v471 = vpack.c.b16 %v444, %v443
        %v472 = vpack.c.b16 %v446, %v445
        %v473 = vpack.c.b16 %v448, %v447
        %v474 = vpack.c.b16 %v450, %v449
        %v475 = vpack.c.b16 %v452, %v451
        %v476 = vpack.c.b16 %v454, %v453
        %v477 = vpack.c.b16 %v456, %v455
        %v478 = vpack.c.b16 %v458, %v457
        %v479 = vpack.c.b16 %v460, %v459
        %v480 = vpack.c.b16 %v462, %v461
        %v481 = vpack.c.b16 %v464, %v463
        %v482 = vpack.c.b16 %v466, %v465
        %499 = vmatprep.subr.bf16.mxu0 0
        %500 = vmatpush1.bf16.msra.mxu0 %v467
        %501 = vmatprep.subr.bf16.mxu0 0
        %502 = vmatpush1.bf16.msra.mxu0 %v468
        %503 = vmatprep.subr.bf16.mxu0 0
        %504 = vmatpush1.bf16.msra.mxu0 %v469
        %505 = vmatprep.subr.bf16.mxu0 0
        %506 = vmatpush1.bf16.msra.mxu0 %v470
        %507 = vmatprep.subr.bf16.mxu0 0
        %508 = vmatpush1.bf16.msra.mxu0 %v471
        %509 = vmatprep.subr.bf16.mxu0 0
        %510 = vmatpush1.bf16.msra.mxu0 %v472
        %511 = vmatprep.subr.bf16.mxu0 0
        %512 = vmatpush1.bf16.msra.mxu0 %v473
        %513 = vmatprep.subr.bf16.mxu0 0
        %514 = vmatpush1.bf16.msra.mxu0 %v474
        %515 = vmatprep.subr.bf16.mxu0 0
        %516 = vmatpush1.bf16.msra.mxu0 %v475
        %517 = vmatprep.subr.bf16.mxu0 0
        %518 = vmatpush1.bf16.msra.mxu0 %v476
        %519 = vmatprep.subr.bf16.mxu0 0
        %520 = vmatpush1.bf16.msra.mxu0 %v477
        %521 = vmatprep.subr.bf16.mxu0 0
        %522 = vmatpush1.bf16.msra.mxu0 %v478
        %523 = vmatprep.subr.bf16.mxu0 0
        %524 = vmatpush1.bf16.msra.mxu0 %v479
        %525 = vmatprep.subr.bf16.mxu0 0
        %526 = vmatpush1.bf16.msra.mxu0 %v480
        %527 = vmatprep.subr.bf16.mxu0 0
        %528 = vmatpush1.bf16.msra.mxu0 %v481
        %529 = vmatprep.subr.bf16.mxu0 0
        %530 = vmatpush1.bf16.msra.mxu0 %v482
        %531 = vmatprep.mubr.bf16.mxu0 %v388
        %532 = vmatmul.mubr.bf16.gmra.mrb[0].mxu0 %v387
        %v533 = vpop.f32.mrb[0].mxu0
        %v534 = vadd.f32 0.0, %v533
        %v535 = vpop.f32.mrb[0].mxu0
        %v536 = vpop.f32.mrb[0].mxu0
        %v537 = vadd.f32 0.0, %v536
        %v538 = vpop.f32.mrb[0].mxu0
        %539 = vmatprep.mubr.bf16.mxu0 %v390
        %540 = vmatmul.mubr.bf16.gmra.mrb[0].mxu0 %v389
        %v541 = vpop.f32.mrb[0].mxu0
        %v542 = vadd.f32 0.0, %v541
        %v543 = vpop.f32.mrb[0].mxu0
        %v544 = vpop.f32.mrb[0].mxu0
        %v545 = vadd.f32 0.0, %v544
        %v546 = vpop.f32.mrb[0].mxu0
        %547 = vmatprep.mubr.bf16.mxu0 %v392
        %548 = vmatmul.mubr.bf16.gmra.mrb[0].mxu0 %v391
        %v549 = vpop.f32.mrb[0].mxu0
        %v550 = vadd.f32 0.0, %v549
        %v551 = vpop.f32.mrb[0].mxu0
        %v552 = vpop.f32.mrb[0].mxu0
        %v553 = vadd.f32 0.0, %v552
        %v554 = vpop.f32.mrb[0].mxu0
        %555 = vmatprep.mubr.bf16.mxu0 %v394
        %556 = vmatmul.mubr.bf16.gmra.mrb[0].mxu0 %v393
        %v557 = vpop.f32.mrb[0].mxu0
        %v558 = vadd.f32 0.0, %v557
        %v559 = vpop.f32.mrb[0].mxu0
        %v560 = vpop.f32.mrb[0].mxu0
        %v561 = vadd.f32 0.0, %v560
        %v562 = vpop.f32.mrb[0].mxu0
        %563 = vdwg.mxu0
        %v564 = vpack.c.bf16 %v537, %v534
        %v565 = vpack.c.bf16 %v545, %v542
        %v566 = vpack.c.bf16 %v553, %v550
        %v567 = vpack.c.bf16 %v561, %v558
        %v568 = vld [vmem:[#allocation8] sm:$0xff]
        %v569 = vld [vmem:[#allocation8 + $0x8] sm:$0xff]
        %v570 = vld [vmem:[#allocation8 + $0x10] sm:$0xff]
        %v571 = vld [vmem:[#allocation8 + $0x18] sm:$0xff]
        %v572 = vld [vmem:[#allocation8 + $0x20] sm:$0xff]
        %v573 = vld [vmem:[#allocation8 + $0x28] sm:$0xff]
        %v574 = vld [vmem:[#allocation8 + $0x30] sm:$0xff]
        %v575 = vld [vmem:[#allocation8 + $0x38] sm:$0xff]
        %v576 = vld [vmem:[#allocation8 + $0x40] sm:$0xff]
        %v577 = vld [vmem:[#allocation8 + $0x48] sm:$0xff]
        %v578 = vld [vmem:[#allocation8 + $0x50] sm:$0xff]
        %v579 = vld [vmem:[#allocation8 + $0x58] sm:$0xff]
        %v580 = vld [vmem:[#allocation8 + $0x60] sm:$0xff]
        %v581 = vld [vmem:[#allocation8 + $0x68] sm:$0xff]
        %v582 = vld [vmem:[#allocation8 + $0x70] sm:$0xff]
        %v583 = vld [vmem:[#allocation8 + $0x78] sm:$0xff]
        %v584 = vld [vmem:[#allocation8 + $0x80] sm:$0xff]
        %v585 = vld [vmem:[#allocation8 + $0x88] sm:$0xff]
        %v586 = vld [vmem:[#allocation8 + $0x90] sm:$0xff]
        %v587 = vld [vmem:[#allocation8 + $0x98] sm:$0xff]
        %v588 = vld [vmem:[#allocation8 + $0xa0] sm:$0xff]
        %v589 = vld [vmem:[#allocation8 + $0xa8] sm:$0xff]
        %v590 = vld [vmem:[#allocation8 + $0xb0] sm:$0xff]
        %v591 = vld [vmem:[#allocation8 + $0xb8] sm:$0xff]
        %v592 = vld [vmem:[#allocation8 + $0xc0] sm:$0xff]
        %v593 = vld [vmem:[#allocation8 + $0xc8] sm:$0xff]
        %v594 = vld [vmem:[#allocation8 + $0xd0] sm:$0xff]
        %v595 = vld [vmem:[#allocation8 + $0xd8] sm:$0xff]
        %v596 = vld [vmem:[#allocation8 + $0xe0] sm:$0xff]
        %v597 = vld [vmem:[#allocation8 + $0xe8] sm:$0xff]
        %v598 = vld [vmem:[#allocation8 + $0xf0] sm:$0xff]
        %v599 = vld [vmem:[#allocation8 + $0xf8] sm:$0xff]
        %v600 = vld [vmem:[#allocation8 + $0x100] sm:$0xff]
        %v601 = vld [vmem:[#allocation8 + $0x108] sm:$0xff]
        %v602 = vld [vmem:[#allocation8 + $0x110] sm:$0xff]
        %v603 = vld [vmem:[#allocation8 + $0x118] sm:$0xff]
        %v604 = vld [vmem:[#allocation8 + $0x120] sm:$0xff]
        %v605 = vld [vmem:[#allocation8 + $0x128] sm:$0xff]
        %v606 = vld [vmem:[#allocation8 + $0x130] sm:$0xff]
        %v607 = vld [vmem:[#allocation8 + $0x138] sm:$0xff]
        %v608 = vld [vmem:[#allocation8 + $0x140] sm:$0xff]
        %v609 = vld [vmem:[#allocation8 + $0x148] sm:$0xff]
        %v610 = vld [vmem:[#allocation8 + $0x150] sm:$0xff]
        %v611 = vld [vmem:[#allocation8 + $0x158] sm:$0xff]
        %v612 = vld [vmem:[#allocation8 + $0x160] sm:$0xff]
        %v613 = vld [vmem:[#allocation8 + $0x168] sm:$0xff]
        %v614 = vld [vmem:[#allocation8 + $0x170] sm:$0xff]
        %v615 = vld [vmem:[#allocation8 + $0x178] sm:$0xff]
        %v616 = vld [vmem:[#allocation8 + $0x180] sm:$0xff]
        %v617 = vld [vmem:[#allocation8 + $0x188] sm:$0xff]
        %v618 = vld [vmem:[#allocation8 + $0x190] sm:$0xff]
        %v619 = vld [vmem:[#allocation8 + $0x198] sm:$0xff]
        %v620 = vld [vmem:[#allocation8 + $0x1a0] sm:$0xff]
        %v621 = vld [vmem:[#allocation8 + $0x1a8] sm:$0xff]
        %v622 = vld [vmem:[#allocation8 + $0x1b0] sm:$0xff]
        %v623 = vld [vmem:[#allocation8 + $0x1b8] sm:$0xff]
        %v624 = vld [vmem:[#allocation8 + $0x1c0] sm:$0xff]
        %v625 = vld [vmem:[#allocation8 + $0x1c8] sm:$0xff]
        %v626 = vld [vmem:[#allocation8 + $0x1d0] sm:$0xff]
        %v627 = vld [vmem:[#allocation8 + $0x1d8] sm:$0xff]
        %v628 = vld [vmem:[#allocation8 + $0x1e0] sm:$0xff]
        %v629 = vld [vmem:[#allocation8 + $0x1e8] sm:$0xff]
        %v630 = vld [vmem:[#allocation8 + $0x1f0] sm:$0xff]
        %v631 = vld [vmem:[#allocation8 + $0x1f8] sm:$0xff]
        %v696 = vunpack.c.l.b16 %v568
        %v697 = vunpack.c.h.b16 %v568
        %v698 = vunpack.c.l.b16 %v569
        %v699 = vunpack.c.h.b16 %v569
        %v700 = vunpack.c.l.b16 %v570
        %v701 = vunpack.c.h.b16 %v570
        %v702 = vunpack.c.l.b16 %v571
        %v703 = vunpack.c.h.b16 %v571
        %v704 = vunpack.c.l.b16 %v572
        %v705 = vunpack.c.h.b16 %v572
        %v706 = vunpack.c.l.b16 %v573
        %v707 = vunpack.c.h.b16 %v573
        %v708 = vunpack.c.l.b16 %v574
        %v709 = vunpack.c.h.b16 %v574
        %v710 = vunpack.c.l.b16 %v575
        %v711 = vunpack.c.h.b16 %v575
        %v712 = vunpack.c.l.b16 %v576
        %v713 = vunpack.c.h.b16 %v576
        %v714 = vunpack.c.l.b16 %v577
        %v715 = vunpack.c.h.b16 %v577
        %v716 = vunpack.c.l.b16 %v578
        %v717 = vunpack.c.h.b16 %v578
        %v718 = vunpack.c.l.b16 %v579
        %v719 = vunpack.c.h.b16 %v579
        %v720 = vunpack.c.l.b16 %v580
        %v721 = vunpack.c.h.b16 %v580
        %v722 = vunpack.c.l.b16 %v581
        %v723 = vunpack.c.h.b16 %v581
        %v724 = vunpack.c.l.b16 %v582
        %v725 = vunpack.c.h.b16 %v582
        %v726 = vunpack.c.l.b16 %v583
        %v727 = vunpack.c.h.b16 %v583
        %v728 = vunpack.c.l.b16 %v584
        %v729 = vunpack.c.h.b16 %v584
        %v730 = vunpack.c.l.b16 %v585
        %v731 = vunpack.c.h.b16 %v585
        %v732 = vunpack.c.l.b16 %v586
        %v733 = vunpack.c.h.b16 %v586
        %v734 = vunpack.c.l.b16 %v587
        %v735 = vunpack.c.h.b16 %v587
        %v736 = vunpack.c.l.b16 %v588
        %v737 = vunpack.c.h.b16 %v588
        %v738 = vunpack.c.l.b16 %v589
        %v739 = vunpack.c.h.b16 %v589
        %v740 = vunpack.c.l.b16 %v590
        %v741 = vunpack.c.h.b16 %v590
        %v742 = vunpack.c.l.b16 %v591
        %v743 = vunpack.c.h.b16 %v591
        %v744 = vunpack.c.l.b16 %v592
        %v745 = vunpack.c.h.b16 %v592
        %v746 = vunpack.c.l.b16 %v593
        %v747 = vunpack.c.h.b16 %v593
        %v748 = vunpack.c.l.b16 %v594
        %v749 = vunpack.c.h.b16 %v594
        %v750 = vunpack.c.l.b16 %v595
        %v751 = vunpack.c.h.b16 %v595
        %v752 = vunpack.c.l.b16 %v596
        %v753 = vunpack.c.h.b16 %v596
        %v754 = vunpack.c.l.b16 %v597
        %v755 = vunpack.c.h.b16 %v597
        %v756 = vunpack.c.l.b16 %v598
        %v757 = vunpack.c.h.b16 %v598
        %v758 = vunpack.c.l.b16 %v599
        %v759 = vunpack.c.h.b16 %v599
        %v760 = vunpack.c.l.b16 %v600
        %v761 = vunpack.c.h.b16 %v600
        %v762 = vunpack.c.l.b16 %v601
        %v763 = vunpack.c.h.b16 %v601
        %v764 = vunpack.c.l.b16 %v602
        %v765 = vunpack.c.h.b16 %v602
        %v766 = vunpack.c.l.b16 %v603
        %v767 = vunpack.c.h.b16 %v603
        %v768 = vunpack.c.l.b16 %v604
        %v769 = vunpack.c.h.b16 %v604
        %v770 = vunpack.c.l.b16 %v605
        %v771 = vunpack.c.h.b16 %v605
        %v772 = vunpack.c.l.b16 %v606
        %v773 = vunpack.c.h.b16 %v606
        %v774 = vunpack.c.l.b16 %v607
        %v775 = vunpack.c.h.b16 %v607
        %v776 = vunpack.c.l.b16 %v608
        %v777 = vunpack.c.h.b16 %v608
        %v778 = vunpack.c.l.b16 %v609
        %v779 = vunpack.c.h.b16 %v609
        %v780 = vunpack.c.l.b16 %v610
        %v781 = vunpack.c.h.b16 %v610
        %v782 = vunpack.c.l.b16 %v611
        %v783 = vunpack.c.h.b16 %v611
        %v784 = vunpack.c.l.b16 %v612
        %v785 = vunpack.c.h.b16 %v612
        %v786 = vunpack.c.l.b16 %v613
        %v787 = vunpack.c.h.b16 %v613
        %v788 = vunpack.c.l.b16 %v614
        %v789 = vunpack.c.h.b16 %v614
        %v790 = vunpack.c.l.b16 %v615
        %v791 = vunpack.c.h.b16 %v615
        %v792 = vunpack.c.l.b16 %v616
        %v793 = vunpack.c.h.b16 %v616
        %v794 = vunpack.c.l.b16 %v617
        %v795 = vunpack.c.h.b16 %v617
        %v796 = vunpack.c.l.b16 %v618
        %v797 = vunpack.c.h.b16 %v618
        %v798 = vunpack.c.l.b16 %v619
        %v799 = vunpack.c.h.b16 %v619
        %v800 = vunpack.c.l.b16 %v620
        %v801 = vunpack.c.h.b16 %v620
        %v802 = vunpack.c.l.b16 %v621
        %v803 = vunpack.c.h.b16 %v621
        %v804 = vunpack.c.l.b16 %v622
        %v805 = vunpack.c.h.b16 %v622
        %v806 = vunpack.c.l.b16 %v623
        %v807 = vunpack.c.h.b16 %v623
        %v808 = vunpack.c.l.b16 %v624
        %v809 = vunpack.c.h.b16 %v624
        %v810 = vunpack.c.l.b16 %v625
        %v811 = vunpack.c.h.b16 %v625
        %v812 = vunpack.c.l.b16 %v626
        %v813 = vunpack.c.h.b16 %v626
        %v814 = vunpack.c.l.b16 %v627
        %v815 = vunpack.c.h.b16 %v627
        %v816 = vunpack.c.l.b16 %v628
        %v817 = vunpack.c.h.b16 %v628
        %v818 = vunpack.c.l.b16 %v629
        %v819 = vunpack.c.h.b16 %v629
        %v820 = vunpack.c.l.b16 %v630
        %v821 = vunpack.c.h.b16 %v630
        %v822 = vunpack.c.l.b16 %v631
        %v823 = vunpack.c.h.b16 %v631
        %v824 = vpack.c.b16 %v712, %v696
        %v825 = vpack.c.b16 %v713, %v697
        %v826 = vpack.c.b16 %v714, %v698
        %v827 = vpack.c.b16 %v715, %v699
        %v828 = vpack.c.b16 %v716, %v700
        %v829 = vpack.c.b16 %v717, %v701
        %v830 = vpack.c.b16 %v718, %v702
        %v831 = vpack.c.b16 %v719, %v703
        %v832 = vpack.c.b16 %v720, %v704
        %v833 = vpack.c.b16 %v721, %v705
        %v834 = vpack.c.b16 %v722, %v706
        %v835 = vpack.c.b16 %v723, %v707
        %v836 = vpack.c.b16 %v724, %v708
        %v837 = vpack.c.b16 %v725, %v709
        %v838 = vpack.c.b16 %v726, %v710
        %v839 = vpack.c.b16 %v727, %v711
        %v840 = vpack.c.b16 %v744, %v728
        %v841 = vpack.c.b16 %v745, %v729
        %v842 = vpack.c.b16 %v746, %v730
        %v843 = vpack.c.b16 %v747, %v731
        %v844 = vpack.c.b16 %v748, %v732
        %v845 = vpack.c.b16 %v749, %v733
        %v846 = vpack.c.b16 %v750, %v734
        %v847 = vpack.c.b16 %v751, %v735
        %v848 = vpack.c.b16 %v752, %v736
        %v849 = vpack.c.b16 %v753, %v737
        %v850 = vpack.c.b16 %v754, %v738
        %v851 = vpack.c.b16 %v755, %v739
        %v852 = vpack.c.b16 %v756, %v740
        %v853 = vpack.c.b16 %v757, %v741
        %v854 = vpack.c.b16 %v758, %v742
        %v855 = vpack.c.b16 %v759, %v743
        %v856 = vpack.c.b16 %v776, %v760
        %v857 = vpack.c.b16 %v777, %v761
        %v858 = vpack.c.b16 %v778, %v762
        %v859 = vpack.c.b16 %v779, %v763
        %v860 = vpack.c.b16 %v780, %v764
        %v861 = vpack.c.b16 %v781, %v765
        %v862 = vpack.c.b16 %v782, %v766
        %v863 = vpack.c.b16 %v783, %v767
        %v864 = vpack.c.b16 %v784, %v768
        %v865 = vpack.c.b16 %v785, %v769
        %v866 = vpack.c.b16 %v786, %v770
        %v867 = vpack.c.b16 %v787, %v771
        %v868 = vpack.c.b16 %v788, %v772
        %v869 = vpack.c.b16 %v789, %v773
        %v870 = vpack.c.b16 %v790, %v774
        %v871 = vpack.c.b16 %v791, %v775
        %v872 = vpack.c.b16 %v808, %v792
        %v873 = vpack.c.b16 %v809, %v793
        %v874 = vpack.c.b16 %v810, %v794
        %v875 = vpack.c.b16 %v811, %v795
        %v876 = vpack.c.b16 %v812, %v796
        %v877 = vpack.c.b16 %v813, %v797
        %v878 = vpack.c.b16 %v814, %v798
        %v879 = vpack.c.b16 %v815, %v799
        %v880 = vpack.c.b16 %v816, %v800
        %v881 = vpack.c.b16 %v817, %v801
        %v882 = vpack.c.b16 %v818, %v802
        %v883 = vpack.c.b16 %v819, %v803
        %v884 = vpack.c.b16 %v820, %v804
        %v885 = vpack.c.b16 %v821, %v805
        %v886 = vpack.c.b16 %v822, %v806
        %v887 = vpack.c.b16 %v823, %v807
        %vm952 = vcmask 523264
        %v954 = vsel %vm952, %v564, 0
        %v957 = vsel %vm952, %v565, 0
        %v960 = vsel %vm952, %v566, 0
        %v963 = vsel %vm952, %v567, 0
        %965 = vmatprep.subr.bf16.mxu0 %v825
        %966 = vmatpush1.bf16.msra.mxu0 %v824
        %967 = vmatprep.subr.bf16.mxu0 %v841
        %968 = vmatpush1.bf16.msra.mxu0 %v840
        %969 = vmatprep.subr.bf16.mxu0 %v857
        %970 = vmatpush1.bf16.msra.mxu0 %v856
        %971 = vmatprep.subr.bf16.mxu0 %v873
        %972 = vmatpush1.bf16.msra.mxu0 %v872
        %973 = vmatprep.subr.bf16.mxu0 0
        %974 = vmatpush1.bf16.msra.mxu0 0
        %975 = vmatprep.subr.bf16.mxu0 0
        %976 = vmatpush1.bf16.msra.mxu0 0
        %977 = vmatprep.subr.bf16.mxu0 0
        %978 = vmatpush1.bf16.msra.mxu0 0
        %979 = vmatprep.subr.bf16.mxu0 0
        %980 = vmatpush1.bf16.msra.mxu0 0
        %981 = vmatprep.subr.bf16.mxu0 0
        %982 = vmatpush1.bf16.msra.mxu0 0
        %983 = vmatprep.subr.bf16.mxu0 0
        %984 = vmatpush1.bf16.msra.mxu0 0
        %985 = vmatprep.subr.bf16.mxu0 0
        %986 = vmatpush1.bf16.msra.mxu0 0
        %987 = vmatprep.subr.bf16.mxu0 0
        %988 = vmatpush1.bf16.msra.mxu0 0
        %989 = vmatprep.subr.bf16.mxu0 0
        %990 = vmatpush1.bf16.msra.mxu0 0
        %991 = vmatprep.subr.bf16.mxu0 0
        %992 = vmatpush1.bf16.msra.mxu0 0
        %993 = vmatprep.subr.bf16.mxu0 0
        %994 = vmatpush1.bf16.msra.mxu0 0
        %995 = vmatprep.subr.bf16.mxu0 0
        %996 = vmatpush1.bf16.msra.mxu0 0
        %997 = vmatprep.mubr.bf16.mxu0 0
        %998 = vmatmul.mubr.bf16.gmra.mrb[0].mxu0 %v954
        %v999 = vpop.f32.mrb[0].mxu0
        %v1000 = vadd.f32 0.0, %v999
        %v1001 = vpop.f32.mrb[0].mxu0
        %v1002 = vadd.f32 0.0, %v1001
        %v1003 = vpop.f32.mrb[0].mxu0
        %v1004 = vadd.f32 0.0, %v1003
        %v1005 = vpop.f32.mrb[0].mxu0
        %v1006 = vadd.f32 0.0, %v1005
        %1007 = vmatprep.mubr.bf16.mxu0 0
        %1008 = vmatmul.mubr.bf16.gmra.mrb[0].mxu0 %v957
        %v1009 = vpop.f32.mrb[0].mxu0
        %v1010 = vadd.f32 0.0, %v1009
        %v1011 = vpop.f32.mrb[0].mxu0
        %v1012 = vadd.f32 0.0, %v1011
        %v1013 = vpop.f32.mrb[0].mxu0
        %v1014 = vadd.f32 0.0, %v1013
        %v1015 = vpop.f32.mrb[0].mxu0
        %v1016 = vadd.f32 0.0, %v1015
        %1017 = vmatprep.mubr.bf16.mxu0 0
        %1018 = vmatmul.mubr.bf16.gmra.mrb[0].mxu0 %v960
        %v1019 = vpop.f32.mrb[0].mxu0
        %v1020 = vadd.f32 0.0, %v1019
        %v1021 = vpop.f32.mrb[0].mxu0
        %v1022 = vadd.f32 0.0, %v1021
        %v1023 = vpop.f32.mrb[0].mxu0
        %v1024 = vadd.f32 0.0, %v1023
        %v1025 = vpop.f32.mrb[0].mxu0
        %v1026 = vadd.f32 0.0, %v1025
        %1027 = vmatprep.mubr.bf16.mxu0 0
        %1028 = vmatmul.mubr.bf16.gmra.mrb[0].mxu0 %v963
        %v1029 = vpop.f32.mrb[0].mxu0
        %v1030 = vadd.f32 0.0, %v1029
        %v1031 = vpop.f32.mrb[0].mxu0
        %v1032 = vadd.f32 0.0, %v1031
        %v1033 = vpop.f32.mrb[0].mxu0
        %v1034 = vadd.f32 0.0, %v1033
        %v1035 = vpop.f32.mrb[0].mxu0
        %v1036 = vadd.f32 0.0, %v1035
        %1037 = vdwg.mxu0
        %1038 = vmatprep.subr.bf16.mxu0 %v827
        %1039 = vmatpush1.bf16.msra.mxu0 %v826
        %1040 = vmatprep.subr.bf16.mxu0 %v843
        %1041 = vmatpush1.bf16.msra.mxu0 %v842
        %1042 = vmatprep.subr.bf16.mxu0 %v859
        %1043 = vmatpush1.bf16.msra.mxu0 %v858
        %1044 = vmatprep.subr.bf16.mxu0 %v875
        %1045 = vmatpush1.bf16.msra.mxu0 %v874
        %1046 = vmatprep.subr.bf16.mxu0 0
        %1047 = vmatpush1.bf16.msra.mxu0 0
        %1048 = vmatprep.subr.bf16.mxu0 0
        %1049 = vmatpush1.bf16.msra.mxu0 0
        %1050 = vmatprep.subr.bf16.mxu0 0
        %1051 = vmatpush1.bf16.msra.mxu0 0
        %1052 = vmatprep.subr.bf16.mxu0 0
        %1053 = vmatpush1.bf16.msra.mxu0 0
        %1054 = vmatprep.subr.bf16.mxu0 0
        %1055 = vmatpush1.bf16.msra.mxu0 0
        %1056 = vmatprep.subr.bf16.mxu0 0
        %1057 = vmatpush1.bf16.msra.mxu0 0
        %1058 = vmatprep.subr.bf16.mxu0 0
        %1059 = vmatpush1.bf16.msra.mxu0 0
        %1060 = vmatprep.subr.bf16.mxu0 0
        %1061 = vmatpush1.bf16.msra.mxu0 0
        %1062 = vmatprep.subr.bf16.mxu0 0
        %1063 = vmatpush1.bf16.msra.mxu0 0
        %1064 = vmatprep.subr.bf16.mxu0 0
        %1065 = vmatpush1.bf16.msra.mxu0 0
        %1066 = vmatprep.subr.bf16.mxu0 0
        %1067 = vmatpush1.bf16.msra.mxu0 0
        %1068 = vmatprep.subr.bf16.mxu0 0
        %1069 = vmatpush1.bf16.msra.mxu0 0
        %1070 = vmatprep.mubr.bf16.mxu0 0
        %1071 = vmatmul.mubr.bf16.gmra.mrb[0].mxu0 %v954
        %v1072 = vpop.f32.mrb[0].mxu0
        %v1073 = vadd.f32 0.0, %v1072
        %v1074 = vpop.f32.mrb[0].mxu0
        %v1075 = vadd.f32 0.0, %v1074
        %v1076 = vpop.f32.mrb[0].mxu0
        %v1077 = vadd.f32 0.0, %v1076
        %v1078 = vpop.f32.mrb[0].mxu0
        %v1079 = vadd.f32 0.0, %v1078
        %1080 = vmatprep.mubr.bf16.mxu0 0
        %1081 = vmatmul.mubr.bf16.gmra.mrb[0].mxu0 %v957
        %v1082 = vpop.f32.mrb[0].mxu0
        %v1083 = vadd.f32 0.0, %v1082
        %v1084 = vpop.f32.mrb[0].mxu0
        %v1085 = vadd.f32 0.0, %v1084
        %v1086 = vpop.f32.mrb[0].mxu0
        %v1087 = vadd.f32 0.0, %v1086
        %v1088 = vpop.f32.mrb[0].mxu0
        %v1089 = vadd.f32 0.0, %v1088
        %1090 = vmatprep.mubr.bf16.mxu0 0
        %1091 = vmatmul.mubr.bf16.gmra.mrb[0].mxu0 %v960
        %v1092 = vpop.f32.mrb[0].mxu0
        %v1093 = vadd.f32 0.0, %v1092
        %v1094 = vpop.f32.mrb[0].mxu0
        %v1095 = vadd.f32 0.0, %v1094
        %v1096 = vpop.f32.mrb[0].mxu0
        %v1097 = vadd.f32 0.0, %v1096
        %v1098 = vpop.f32.mrb[0].mxu0
        %v1099 = vadd.f32 0.0, %v1098
        %1100 = vmatprep.mubr.bf16.mxu0 0
        %1101 = vmatmul.mubr.bf16.gmra.mrb[0].mxu0 %v963
        %v1102 = vpop.f32.mrb[0].mxu0
        %v1103 = vadd.f32 0.0, %v1102
        %v1104 = vpop.f32.mrb[0].mxu0
        %v1105 = vadd.f32 0.0, %v1104
        %v1106 = vpop.f32.mrb[0].mxu0
        %v1107 = vadd.f32 0.0, %v1106
        %v1108 = vpop.f32.mrb[0].mxu0
        %v1109 = vadd.f32 0.0, %v1108
        %1110 = vdwg.mxu0
        %1111 = vmatprep.subr.bf16.mxu0 %v829
        %1112 = vmatpush1.bf16.msra.mxu0 %v828
        %1113 = vmatprep.subr.bf16.mxu0 %v845
        %1114 = vmatpush1.bf16.msra.mxu0 %v844
        %1115 = vmatprep.subr.bf16.mxu0 %v861
        %1116 = vmatpush1.bf16.msra.mxu0 %v860
        %1117 = vmatprep.subr.bf16.mxu0 %v877
        %1118 = vmatpush1.bf16.msra.mxu0 %v876
        %1119 = vmatprep.subr.bf16.mxu0 0
        %1120 = vmatpush1.bf16.msra.mxu0 0
        %1121 = vmatprep.subr.bf16.mxu0 0
        %1122 = vmatpush1.bf16.msra.mxu0 0
        %1123 = vmatprep.subr.bf16.mxu0 0
        %1124 = vmatpush1.bf16.msra.mxu0 0
        %1125 = vmatprep.subr.bf16.mxu0 0
        %1126 = vmatpush1.bf16.msra.mxu0 0
        %1127 = vmatprep.subr.bf16.mxu0 0
        %1128 = vmatpush1.bf16.msra.mxu0 0
        %1129 = vmatprep.subr.bf16.mxu0 0
        %1130 = vmatpush1.bf16.msra.mxu0 0
        %1131 = vmatprep.subr.bf16.mxu0 0
        %1132 = vmatpush1.bf16.msra.mxu0 0
        %1133 = vmatprep.subr.bf16.mxu0 0
        %1134 = vmatpush1.bf16.msra.mxu0 0
        %1135 = vmatprep.subr.bf16.mxu0 0
        %1136 = vmatpush1.bf16.msra.mxu0 0
        %1137 = vmatprep.subr.bf16.mxu0 0
        %1138 = vmatpush1.bf16.msra.mxu0 0
        %1139 = vmatprep.subr.bf16.mxu0 0
        %1140 = vmatpush1.bf16.msra.mxu0 0
        %1141 = vmatprep.subr.bf16.mxu0 0
        %1142 = vmatpush1.bf16.msra.mxu0 0
        %1143 = vmatprep.mubr.bf16.mxu0 0
        %1144 = vmatmul.mubr.bf16.gmra.mrb[0].mxu0 %v954
        %v1145 = vpop.f32.mrb[0].mxu0
        %v1146 = vadd.f32 0.0, %v1145
        %v1147 = vpop.f32.mrb[0].mxu0
        %v1148 = vadd.f32 0.0, %v1147
        %v1149 = vpop.f32.mrb[0].mxu0
        %v1150 = vadd.f32 0.0, %v1149
        %v1151 = vpop.f32.mrb[0].mxu0
        %v1152 = vadd.f32 0.0, %v1151
        %1153 = vmatprep.mubr.bf16.mxu0 0
        %1154 = vmatmul.mubr.bf16.gmra.mrb[0].mxu0 %v957
        %v1155 = vpop.f32.mrb[0].mxu0
        %v1156 = vadd.f32 0.0, %v1155
        %v1157 = vpop.f32.mrb[0].mxu0
        %v1158 = vadd.f32 0.0, %v1157
        %v1159 = vpop.f32.mrb[0].mxu0
        %v1160 = vadd.f32 0.0, %v1159
        %v1161 = vpop.f32.mrb[0].mxu0
        %v1162 = vadd.f32 0.0, %v1161
        %1163 = vmatprep.mubr.bf16.mxu0 0
        %1164 = vmatmul.mubr.bf16.gmra.mrb[0].mxu0 %v960
        %v1165 = vpop.f32.mrb[0].mxu0
        %v1166 = vadd.f32 0.0, %v1165
        %v1167 = vpop.f32.mrb[0].mxu0
        %v1168 = vadd.f32 0.0, %v1167
        %v1169 = vpop.f32.mrb[0].mxu0
        %v1170 = vadd.f32 0.0, %v1169
        %v1171 = vpop.f32.mrb[0].mxu0
        %v1172 = vadd.f32 0.0, %v1171
        %1173 = vmatprep.mubr.bf16.mxu0 0
        %1174 = vmatmul.mubr.bf16.gmra.mrb[0].mxu0 %v963
        %v1175 = vpop.f32.mrb[0].mxu0
        %v1176 = vadd.f32 0.0, %v1175
        %v1177 = vpop.f32.mrb[0].mxu0
        %v1178 = vadd.f32 0.0, %v1177
        %v1179 = vpop.f32.mrb[0].mxu0
        %v1180 = vadd.f32 0.0, %v1179
        %v1181 = vpop.f32.mrb[0].mxu0
        %v1182 = vadd.f32 0.0, %v1181
        %1183 = vdwg.mxu0
        %1184 = vmatprep.subr.bf16.mxu0 %v831
        %1185 = vmatpush1.bf16.msra.mxu0 %v830
        %1186 = vmatprep.subr.bf16.mxu0 %v847
        %1187 = vmatpush1.bf16.msra.mxu0 %v846
        %1188 = vmatprep.subr.bf16.mxu0 %v863
        %1189 = vmatpush1.bf16.msra.mxu0 %v862
        %1190 = vmatprep.subr.bf16.mxu0 %v879
        %1191 = vmatpush1.bf16.msra.mxu0 %v878
        %1192 = vmatprep.subr.bf16.mxu0 0
        %1193 = vmatpush1.bf16.msra.mxu0 0
        %1194 = vmatprep.subr.bf16.mxu0 0
        %1195 = vmatpush1.bf16.msra.mxu0 0
        %1196 = vmatprep.subr.bf16.mxu0 0
        %1197 = vmatpush1.bf16.msra.mxu0 0
        %1198 = vmatprep.subr.bf16.mxu0 0
        %1199 = vmatpush1.bf16.msra.mxu0 0
        %1200 = vmatprep.subr.bf16.mxu0 0
        %1201 = vmatpush1.bf16.msra.mxu0 0
        %1202 = vmatprep.subr.bf16.mxu0 0
        %1203 = vmatpush1.bf16.msra.mxu0 0
        %1204 = vmatprep.subr.bf16.mxu0 0
        %1205 = vmatpush1.bf16.msra.mxu0 0
        %1206 = vmatprep.subr.bf16.mxu0 0
        %1207 = vmatpush1.bf16.msra.mxu0 0
        %1208 = vmatprep.subr.bf16.mxu0 0
        %1209 = vmatpush1.bf16.msra.mxu0 0
        %1210 = vmatprep.subr.bf16.mxu0 0
        %1211 = vmatpush1.bf16.msra.mxu0 0
        %1212 = vmatprep.subr.bf16.mxu0 0
        %1213 = vmatpush1.bf16.msra.mxu0 0
        %1214 = vmatprep.subr.bf16.mxu0 0
        %1215 = vmatpush1.bf16.msra.mxu0 0
        %1216 = vmatprep.mubr.bf16.mxu0 0
        %1217 = vmatmul.mubr.bf16.gmra.mrb[0].mxu0 %v954
        %v1218 = vpop.f32.mrb[0].mxu0
        %v1219 = vadd.f32 0.0, %v1218
        %v1220 = vpop.f32.mrb[0].mxu0
        %v1221 = vadd.f32 0.0, %v1220
        %v1222 = vpop.f32.mrb[0].mxu0
        %v1223 = vadd.f32 0.0, %v1222
        %v1224 = vpop.f32.mrb[0].mxu0
        %v1225 = vadd.f32 0.0, %v1224
        %1226 = vmatprep.mubr.bf16.mxu0 0
        %1227 = vmatmul.mubr.bf16.gmra.mrb[0].mxu0 %v957
        %v1228 = vpop.f32.mrb[0].mxu0
        %v1229 = vadd.f32 0.0, %v1228
        %v1230 = vpop.f32.mrb[0].mxu0
        %v1231 = vadd.f32 0.0, %v1230
        %v1232 = vpop.f32.mrb[0].mxu0
        %v1233 = vadd.f32 0.0, %v1232
        %v1234 = vpop.f32.mrb[0].mxu0
        %v1235 = vadd.f32 0.0, %v1234
        %1236 = vmatprep.mubr.bf16.mxu0 0
        %1237 = vmatmul.mubr.bf16.gmra.mrb[0].mxu0 %v960
        %v1238 = vpop.f32.mrb[0].mxu0
        %v1239 = vadd.f32 0.0, %v1238
        %v1240 = vpop.f32.mrb[0].mxu0
        %v1241 = vadd.f32 0.0, %v1240
        %v1242 = vpop.f32.mrb[0].mxu0
        %v1243 = vadd.f32 0.0, %v1242
        %v1244 = vpop.f32.mrb[0].mxu0
        %v1245 = vadd.f32 0.0, %v1244
        %1246 = vmatprep.mubr.bf16.mxu0 0
        %1247 = vmatmul.mubr.bf16.gmra.mrb[0].mxu0 %v963
        %v1248 = vpop.f32.mrb[0].mxu0
        %v1249 = vadd.f32 0.0, %v1248
        %v1250 = vpop.f32.mrb[0].mxu0
        %v1251 = vadd.f32 0.0, %v1250
        %v1252 = vpop.f32.mrb[0].mxu0
        %v1253 = vadd.f32 0.0, %v1252
        %v1254 = vpop.f32.mrb[0].mxu0
        %v1255 = vadd.f32 0.0, %v1254
        %1256 = vdwg.mxu0
        %1257 = vmatprep.subr.bf16.mxu0 %v833
        %1258 = vmatpush1.bf16.msra.mxu0 %v832
        %1259 = vmatprep.subr.bf16.mxu0 %v849
        %1260 = vmatpush1.bf16.msra.mxu0 %v848
        %1261 = vmatprep.subr.bf16.mxu0 %v865
        %1262 = vmatpush1.bf16.msra.mxu0 %v864
        %1263 = vmatprep.subr.bf16.mxu0 %v881
        %1264 = vmatpush1.bf16.msra.mxu0 %v880
        %1265 = vmatprep.subr.bf16.mxu0 0
        %1266 = vmatpush1.bf16.msra.mxu0 0
        %1267 = vmatprep.subr.bf16.mxu0 0
        %1268 = vmatpush1.bf16.msra.mxu0 0
        %1269 = vmatprep.subr.bf16.mxu0 0
        %1270 = vmatpush1.bf16.msra.mxu0 0
        %1271 = vmatprep.subr.bf16.mxu0 0
        %1272 = vmatpush1.bf16.msra.mxu0 0
        %1273 = vmatprep.subr.bf16.mxu0 0
        %1274 = vmatpush1.bf16.msra.mxu0 0
        %1275 = vmatprep.subr.bf16.mxu0 0
        %1276 = vmatpush1.bf16.msra.mxu0 0
        %1277 = vmatprep.subr.bf16.mxu0 0
        %1278 = vmatpush1.bf16.msra.mxu0 0
        %1279 = vmatprep.subr.bf16.mxu0 0
        %1280 = vmatpush1.bf16.msra.mxu0 0
        %1281 = vmatprep.subr.bf16.mxu0 0
        %1282 = vmatpush1.bf16.msra.mxu0 0
        %1283 = vmatprep.subr.bf16.mxu0 0
        %1284 = vmatpush1.bf16.msra.mxu0 0
        %1285 = vmatprep.subr.bf16.mxu0 0
        %1286 = vmatpush1.bf16.msra.mxu0 0
        %1287 = vmatprep.subr.bf16.mxu0 0
        %1288 = vmatpush1.bf16.msra.mxu0 0
        %1289 = vmatprep.mubr.bf16.mxu0 0
        %1290 = vmatmul.mubr.bf16.gmra.mrb[0].mxu0 %v954
        %v1291 = vpop.f32.mrb[0].mxu0
        %v1292 = vadd.f32 0.0, %v1291
        %v1293 = vpop.f32.mrb[0].mxu0
        %v1294 = vadd.f32 0.0, %v1293
        %v1295 = vpop.f32.mrb[0].mxu0
        %v1296 = vadd.f32 0.0, %v1295
        %v1297 = vpop.f32.mrb[0].mxu0
        %v1298 = vadd.f32 0.0, %v1297
        %1299 = vmatprep.mubr.bf16.mxu0 0
        %1300 = vmatmul.mubr.bf16.gmra.mrb[0].mxu0 %v957
        %v1301 = vpop.f32.mrb[0].mxu0
        %v1302 = vadd.f32 0.0, %v1301
        %v1303 = vpop.f32.mrb[0].mxu0
        %v1304 = vadd.f32 0.0, %v1303
        %v1305 = vpop.f32.mrb[0].mxu0
        %v1306 = vadd.f32 0.0, %v1305
        %v1307 = vpop.f32.mrb[0].mxu0
        %v1308 = vadd.f32 0.0, %v1307
        %1309 = vmatprep.mubr.bf16.mxu0 0
        %1310 = vmatmul.mubr.bf16.gmra.mrb[0].mxu0 %v960
        %v1311 = vpop.f32.mrb[0].mxu0
        %v1312 = vadd.f32 0.0, %v1311
        %v1313 = vpop.f32.mrb[0].mxu0
        %v1314 = vadd.f32 0.0, %v1313
        %v1315 = vpop.f32.mrb[0].mxu0
        %v1316 = vadd.f32 0.0, %v1315
        %v1317 = vpop.f32.mrb[0].mxu0
        %v1318 = vadd.f32 0.0, %v1317
        %1319 = vmatprep.mubr.bf16.mxu0 0
        %1320 = vmatmul.mubr.bf16.gmra.mrb[0].mxu0 %v963
        %v1321 = vpop.f32.mrb[0].mxu0
        %v1322 = vadd.f32 0.0, %v1321
        %v1323 = vpop.f32.mrb[0].mxu0
        %v1324 = vadd.f32 0.0, %v1323
        %v1325 = vpop.f32.mrb[0].mxu0
        %v1326 = vadd.f32 0.0, %v1325
        %v1327 = vpop.f32.mrb[0].mxu0
        %v1328 = vadd.f32 0.0, %v1327
        %1329 = vdwg.mxu0
        %1330 = vmatprep.subr.bf16.mxu0 %v835
        %1331 = vmatpush1.bf16.msra.mxu0 %v834
        %1332 = vmatprep.subr.bf16.mxu0 %v851
        %1333 = vmatpush1.bf16.msra.mxu0 %v850
        %1334 = vmatprep.subr.bf16.mxu0 %v867
        %1335 = vmatpush1.bf16.msra.mxu0 %v866
        %1336 = vmatprep.subr.bf16.mxu0 %v883
        %1337 = vmatpush1.bf16.msra.mxu0 %v882
        %1338 = vmatprep.subr.bf16.mxu0 0
        %1339 = vmatpush1.bf16.msra.mxu0 0
        %1340 = vmatprep.subr.bf16.mxu0 0
        %1341 = vmatpush1.bf16.msra.mxu0 0
        %1342 = vmatprep.subr.bf16.mxu0 0
        %1343 = vmatpush1.bf16.msra.mxu0 0
        %1344 = vmatprep.subr.bf16.mxu0 0
        %1345 = vmatpush1.bf16.msra.mxu0 0
        %1346 = vmatprep.subr.bf16.mxu0 0
        %1347 = vmatpush1.bf16.msra.mxu0 0
        %1348 = vmatprep.subr.bf16.mxu0 0
        %1349 = vmatpush1.bf16.msra.mxu0 0
        %1350 = vmatprep.subr.bf16.mxu0 0
        %1351 = vmatpush1.bf16.msra.mxu0 0
        %1352 = vmatprep.subr.bf16.mxu0 0
        %1353 = vmatpush1.bf16.msra.mxu0 0
        %1354 = vmatprep.subr.bf16.mxu0 0
        %1355 = vmatpush1.bf16.msra.mxu0 0
        %1356 = vmatprep.subr.bf16.mxu0 0
        %1357 = vmatpush1.bf16.msra.mxu0 0
        %1358 = vmatprep.subr.bf16.mxu0 0
        %1359 = vmatpush1.bf16.msra.mxu0 0
        %1360 = vmatprep.subr.bf16.mxu0 0
        %1361 = vmatpush1.bf16.msra.mxu0 0
        %1362 = vmatprep.mubr.bf16.mxu0 0
        %1363 = vmatmul.mubr.bf16.gmra.mrb[0].mxu0 %v954
        %v1364 = vpop.f32.mrb[0].mxu0
        %v1365 = vadd.f32 0.0, %v1364
        %v1366 = vpop.f32.mrb[0].mxu0
        %v1367 = vadd.f32 0.0, %v1366
        %v1368 = vpop.f32.mrb[0].mxu0
        %v1369 = vadd.f32 0.0, %v1368
        %v1370 = vpop.f32.mrb[0].mxu0
        %v1371 = vadd.f32 0.0, %v1370
        %1372 = vmatprep.mubr.bf16.mxu0 0
        %1373 = vmatmul.mubr.bf16.gmra.mrb[0].mxu0 %v957
        %v1374 = vpop.f32.mrb[0].mxu0
        %v1375 = vadd.f32 0.0, %v1374
        %v1376 = vpop.f32.mrb[0].mxu0
        %v1377 = vadd.f32 0.0, %v1376
        %v1378 = vpop.f32.mrb[0].mxu0
        %v1379 = vadd.f32 0.0, %v1378
        %v1380 = vpop.f32.mrb[0].mxu0
        %v1381 = vadd.f32 0.0, %v1380
        %1382 = vmatprep.mubr.bf16.mxu0 0
        %1383 = vmatmul.mubr.bf16.gmra.mrb[0].mxu0 %v960
        %v1384 = vpop.f32.mrb[0].mxu0
        %v1385 = vadd.f32 0.0, %v1384
        %v1386 = vpop.f32.mrb[0].mxu0
        %v1387 = vadd.f32 0.0, %v1386
        %v1388 = vpop.f32.mrb[0].mxu0
        %v1389 = vadd.f32 0.0, %v1388
        %v1390 = vpop.f32.mrb[0].mxu0
        %v1391 = vadd.f32 0.0, %v1390
        %1392 = vmatprep.mubr.bf16.mxu0 0
        %1393 = vmatmul.mubr.bf16.gmra.mrb[0].mxu0 %v963
        %v1394 = vpop.f32.mrb[0].mxu0
        %v1395 = vadd.f32 0.0, %v1394
        %v1396 = vpop.f32.mrb[0].mxu0
        %v1397 = vadd.f32 0.0, %v1396
        %v1398 = vpop.f32.mrb[0].mxu0
        %v1399 = vadd.f32 0.0, %v1398
        %v1400 = vpop.f32.mrb[0].mxu0
        %v1401 = vadd.f32 0.0, %v1400
        %1402 = vdwg.mxu0
        %1403 = vmatprep.subr.bf16.mxu0 %v837
        %1404 = vmatpush1.bf16.msra.mxu0 %v836
        %1405 = vmatprep.subr.bf16.mxu0 %v853
        %1406 = vmatpush1.bf16.msra.mxu0 %v852
        %1407 = vmatprep.subr.bf16.mxu0 %v869
        %1408 = vmatpush1.bf16.msra.mxu0 %v868
        %1409 = vmatprep.subr.bf16.mxu0 %v885
        %1410 = vmatpush1.bf16.msra.mxu0 %v884
        %1411 = vmatprep.subr.bf16.mxu0 0
        %1412 = vmatpush1.bf16.msra.mxu0 0
        %1413 = vmatprep.subr.bf16.mxu0 0
        %1414 = vmatpush1.bf16.msra.mxu0 0
        %1415 = vmatprep.subr.bf16.mxu0 0
        %1416 = vmatpush1.bf16.msra.mxu0 0
        %1417 = vmatprep.subr.bf16.mxu0 0
        %1418 = vmatpush1.bf16.msra.mxu0 0
        %1419 = vmatprep.subr.bf16.mxu0 0
        %1420 = vmatpush1.bf16.msra.mxu0 0
        %1421 = vmatprep.subr.bf16.mxu0 0
        %1422 = vmatpush1.bf16.msra.mxu0 0
        %1423 = vmatprep.subr.bf16.mxu0 0
        %1424 = vmatpush1.bf16.msra.mxu0 0
        %1425 = vmatprep.subr.bf16.mxu0 0
        %1426 = vmatpush1.bf16.msra.mxu0 0
        %1427 = vmatprep.subr.bf16.mxu0 0
        %1428 = vmatpush1.bf16.msra.mxu0 0
        %1429 = vmatprep.subr.bf16.mxu0 0
        %1430 = vmatpush1.bf16.msra.mxu0 0
        %1431 = vmatprep.subr.bf16.mxu0 0
        %1432 = vmatpush1.bf16.msra.mxu0 0
        %1433 = vmatprep.subr.bf16.mxu0 0
        %1434 = vmatpush1.bf16.msra.mxu0 0
        %1435 = vmatprep.mubr.bf16.mxu0 0
        %1436 = vmatmul.mubr.bf16.gmra.mrb[0].mxu0 %v954
        %v1437 = vpop.f32.mrb[0].mxu0
        %v1438 = vadd.f32 0.0, %v1437
        %v1439 = vpop.f32.mrb[0].mxu0
        %v1440 = vadd.f32 0.0, %v1439
        %v1441 = vpop.f32.mrb[0].mxu0
        %v1442 = vadd.f32 0.0, %v1441
        %v1443 = vpop.f32.mrb[0].mxu0
        %v1444 = vadd.f32 0.0, %v1443
        %1445 = vmatprep.mubr.bf16.mxu0 0
        %1446 = vmatmul.mubr.bf16.gmra.mrb[0].mxu0 %v957
        %v1447 = vpop.f32.mrb[0].mxu0
        %v1448 = vadd.f32 0.0, %v1447
        %v1449 = vpop.f32.mrb[0].mxu0
        %v1450 = vadd.f32 0.0, %v1449
        %v1451 = vpop.f32.mrb[0].mxu0
        %v1452 = vadd.f32 0.0, %v1451
        %v1453 = vpop.f32.mrb[0].mxu0
        %v1454 = vadd.f32 0.0, %v1453
        %1455 = vmatprep.mubr.bf16.mxu0 0
        %1456 = vmatmul.mubr.bf16.gmra.mrb[0].mxu0 %v960
        %v1457 = vpop.f32.mrb[0].mxu0
        %v1458 = vadd.f32 0.0, %v1457
        %v1459 = vpop.f32.mrb[0].mxu0
        %v1460 = vadd.f32 0.0, %v1459
        %v1461 = vpop.f32.mrb[0].mxu0
        %v1462 = vadd.f32 0.0, %v1461
        %v1463 = vpop.f32.mrb[0].mxu0
        %v1464 = vadd.f32 0.0, %v1463
        %1465 = vmatprep.mubr.bf16.mxu0 0
        %1466 = vmatmul.mubr.bf16.gmra.mrb[0].mxu0 %v963
        %v1467 = vpop.f32.mrb[0].mxu0
        %v1468 = vadd.f32 0.0, %v1467
        %v1469 = vpop.f32.mrb[0].mxu0
        %v1470 = vadd.f32 0.0, %v1469
        %v1471 = vpop.f32.mrb[0].mxu0
        %v1472 = vadd.f32 0.0, %v1471
        %v1473 = vpop.f32.mrb[0].mxu0
        %v1474 = vadd.f32 0.0, %v1473
        %1475 = vdwg.mxu0
        %1476 = vmatprep.subr.bf16.mxu0 %v839
        %1477 = vmatpush1.bf16.msra.mxu0 %v838
        %1478 = vmatprep.subr.bf16.mxu0 %v855
        %1479 = vmatpush1.bf16.msra.mxu0 %v854
        %1480 = vmatprep.subr.bf16.mxu0 %v871
        %1481 = vmatpush1.bf16.msra.mxu0 %v870
        %1482 = vmatprep.subr.bf16.mxu0 %v887
        %1483 = vmatpush1.bf16.msra.mxu0 %v886
        %1484 = vmatprep.subr.bf16.mxu0 0
        %1485 = vmatpush1.bf16.msra.mxu0 0
        %1486 = vmatprep.subr.bf16.mxu0 0
        %1487 = vmatpush1.bf16.msra.mxu0 0
        %1488 = vmatprep.subr.bf16.mxu0 0
        %1489 = vmatpush1.bf16.msra.mxu0 0
        %1490 = vmatprep.subr.bf16.mxu0 0
        %1491 = vmatpush1.bf16.msra.mxu0 0
        %1492 = vmatprep.subr.bf16.mxu0 0
        %1493 = vmatpush1.bf16.msra.mxu0 0
        %1494 = vmatprep.subr.bf16.mxu0 0
        %1495 = vmatpush1.bf16.msra.mxu0 0
        %1496 = vmatprep.subr.bf16.mxu0 0
        %1497 = vmatpush1.bf16.msra.mxu0 0
        %1498 = vmatprep.subr.bf16.mxu0 0
        %1499 = vmatpush1.bf16.msra.mxu0 0
        %1500 = vmatprep.subr.bf16.mxu0 0
        %1501 = vmatpush1.bf16.msra.mxu0 0
        %1502 = vmatprep.subr.bf16.mxu0 0
        %1503 = vmatpush1.bf16.msra.mxu0 0
        %1504 = vmatprep.subr.bf16.mxu0 0
        %1505 = vmatpush1.bf16.msra.mxu0 0
        %1506 = vmatprep.subr.bf16.mxu0 0
        %1507 = vmatpush1.bf16.msra.mxu0 0
        %1508 = vmatprep.mubr.bf16.mxu0 0
        %1509 = vmatmul.mubr.bf16.gmra.mrb[0].mxu0 %v954
        %v1510 = vpop.f32.mrb[0].mxu0
        %v1511 = vadd.f32 0.0, %v1510
        %v1512 = vpop.f32.mrb[0].mxu0
        %v1513 = vadd.f32 0.0, %v1512
        %v1514 = vpop.f32.mrb[0].mxu0
        %v1515 = vadd.f32 0.0, %v1514
        %v1516 = vpop.f32.mrb[0].mxu0
        %v1517 = vadd.f32 0.0, %v1516
        %1518 = vmatprep.mubr.bf16.mxu0 0
        %1519 = vmatmul.mubr.bf16.gmra.mrb[0].mxu0 %v957
        %v1520 = vpop.f32.mrb[0].mxu0
        %v1521 = vadd.f32 0.0, %v1520
        %v1522 = vpop.f32.mrb[0].mxu0
        %v1523 = vadd.f32 0.0, %v1522
        %v1524 = vpop.f32.mrb[0].mxu0
        %v1525 = vadd.f32 0.0, %v1524
        %v1526 = vpop.f32.mrb[0].mxu0
        %v1527 = vadd.f32 0.0, %v1526
        %1528 = vmatprep.mubr.bf16.mxu0 0
        %1529 = vmatmul.mubr.bf16.gmra.mrb[0].mxu0 %v960
        %v1530 = vpop.f32.mrb[0].mxu0
        %v1531 = vadd.f32 0.0, %v1530
        %v1532 = vpop.f32.mrb[0].mxu0
        %v1533 = vadd.f32 0.0, %v1532
        %v1534 = vpop.f32.mrb[0].mxu0
        %v1535 = vadd.f32 0.0, %v1534
        %v1536 = vpop.f32.mrb[0].mxu0
        %v1537 = vadd.f32 0.0, %v1536
        %1538 = vmatprep.mubr.bf16.mxu0 0
        %1539 = vmatmul.mubr.bf16.gmra.mrb[0].mxu0 %v963
        %v1540 = vpop.f32.mrb[0].mxu0
        %v1541 = vadd.f32 0.0, %v1540
        %v1542 = vpop.f32.mrb[0].mxu0
        %v1543 = vadd.f32 0.0, %v1542
        %v1544 = vpop.f32.mrb[0].mxu0
        %v1545 = vadd.f32 0.0, %v1544
        %v1546 = vpop.f32.mrb[0].mxu0
        %v1547 = vadd.f32 0.0, %v1546
        %1548 = vdwg.mxu0
        %v1549 = vmax.f32 %v1000, 0.0
        %v1550 = vmax.f32 %v1002, 0.0
        %v1551 = vmax.f32 %v1073, 0.0
        %v1552 = vmax.f32 %v1075, 0.0
        %v1553 = vmax.f32 %v1146, 0.0
        %v1554 = vmax.f32 %v1148, 0.0
        %v1555 = vmax.f32 %v1219, 0.0
        %v1556 = vmax.f32 %v1221, 0.0
        %v1557 = vmax.f32 %v1292, 0.0
        %v1558 = vmax.f32 %v1294, 0.0
        %v1559 = vmax.f32 %v1365, 0.0
        %v1560 = vmax.f32 %v1367, 0.0
        %v1561 = vmax.f32 %v1438, 0.0
        %v1562 = vmax.f32 %v1440, 0.0
        %v1563 = vmax.f32 %v1511, 0.0
        %v1564 = vmax.f32 %v1513, 0.0
        %v1565 = vmax.f32 %v1004, 0.0
        %v1566 = vmax.f32 %v1006, 0.0
        %v1567 = vmax.f32 %v1077, 0.0
        %v1568 = vmax.f32 %v1079, 0.0
        %v1569 = vmax.f32 %v1150, 0.0
        %v1570 = vmax.f32 %v1152, 0.0
        %v1571 = vmax.f32 %v1223, 0.0
        %v1572 = vmax.f32 %v1225, 0.0
        %v1573 = vmax.f32 %v1296, 0.0
        %v1574 = vmax.f32 %v1298, 0.0
        %v1575 = vmax.f32 %v1369, 0.0
        %v1576 = vmax.f32 %v1371, 0.0
        %v1577 = vmax.f32 %v1442, 0.0
        %v1578 = vmax.f32 %v1444, 0.0
        %v1579 = vmax.f32 %v1515, 0.0
        %v1580 = vmax.f32 %v1517, 0.0
        %v1581 = vmax.f32 %v1010, 0.0
        %v1582 = vmax.f32 %v1012, 0.0
        %v1583 = vmax.f32 %v1083, 0.0
        %v1584 = vmax.f32 %v1085, 0.0
        %v1585 = vmax.f32 %v1156, 0.0
        %v1586 = vmax.f32 %v1158, 0.0
        %v1587 = vmax.f32 %v1229, 0.0
        %v1588 = vmax.f32 %v1231, 0.0
        %v1589 = vmax.f32 %v1302, 0.0
        %v1590 = vmax.f32 %v1304, 0.0
        %v1591 = vmax.f32 %v1375, 0.0
        %v1592 = vmax.f32 %v1377, 0.0
        %v1593 = vmax.f32 %v1448, 0.0
        %v1594 = vmax.f32 %v1450, 0.0
        %v1595 = vmax.f32 %v1521, 0.0
        %v1596 = vmax.f32 %v1523, 0.0
        %v1597 = vmax.f32 %v1014, 0.0
        %v1598 = vmax.f32 %v1016, 0.0
        %v1599 = vmax.f32 %v1087, 0.0
        %v1600 = vmax.f32 %v1089, 0.0
        %v1601 = vmax.f32 %v1160, 0.0
        %v1602 = vmax.f32 %v1162, 0.0
        %v1603 = vmax.f32 %v1233, 0.0
        %v1604 = vmax.f32 %v1235, 0.0
        %v1605 = vmax.f32 %v1306, 0.0
        %v1606 = vmax.f32 %v1308, 0.0
        %v1607 = vmax.f32 %v1379, 0.0
        %v1608 = vmax.f32 %v1381, 0.0
        %v1609 = vmax.f32 %v1452, 0.0
        %v1610 = vmax.f32 %v1454, 0.0
        %v1611 = vmax.f32 %v1525, 0.0
        %v1612 = vmax.f32 %v1527, 0.0
        %v1613 = vmax.f32 %v1020, 0.0
        %v1614 = vmax.f32 %v1022, 0.0
        %v1615 = vmax.f32 %v1093, 0.0
        %v1616 = vmax.f32 %v1095, 0.0
        %v1617 = vmax.f32 %v1166, 0.0
        %v1618 = vmax.f32 %v1168, 0.0
        %v1619 = vmax.f32 %v1239, 0.0
        %v1620 = vmax.f32 %v1241, 0.0
        %v1621 = vmax.f32 %v1312, 0.0
        %v1622 = vmax.f32 %v1314, 0.0
        %v1623 = vmax.f32 %v1385, 0.0
        %v1624 = vmax.f32 %v1387, 0.0
        %v1625 = vmax.f32 %v1458, 0.0
        %v1626 = vmax.f32 %v1460, 0.0
        %v1627 = vmax.f32 %v1531, 0.0
        %v1628 = vmax.f32 %v1533, 0.0
        %v1629 = vmax.f32 %v1024, 0.0
        %v1630 = vmax.f32 %v1026, 0.0
        %v1631 = vmax.f32 %v1097, 0.0
        %v1632 = vmax.f32 %v1099, 0.0
        %v1633 = vmax.f32 %v1170, 0.0
        %v1634 = vmax.f32 %v1172, 0.0
        %v1635 = vmax.f32 %v1243, 0.0
        %v1636 = vmax.f32 %v1245, 0.0
        %v1637 = vmax.f32 %v1316, 0.0
        %v1638 = vmax.f32 %v1318, 0.0
        %v1639 = vmax.f32 %v1389, 0.0
        %v1640 = vmax.f32 %v1391, 0.0
        %v1641 = vmax.f32 %v1462, 0.0
        %v1642 = vmax.f32 %v1464, 0.0
        %v1643 = vmax.f32 %v1535, 0.0
        %v1644 = vmax.f32 %v1537, 0.0
        %v1645 = vmax.f32 %v1030, 0.0
        %v1646 = vmax.f32 %v1032, 0.0
        %v1647 = vmax.f32 %v1103, 0.0
        %v1648 = vmax.f32 %v1105, 0.0
        %v1649 = vmax.f32 %v1176, 0.0
        %v1650 = vmax.f32 %v1178, 0.0
        %v1651 = vmax.f32 %v1249, 0.0
        %v1652 = vmax.f32 %v1251, 0.0
        %v1653 = vmax.f32 %v1322, 0.0
        %v1654 = vmax.f32 %v1324, 0.0
        %v1655 = vmax.f32 %v1395, 0.0
        %v1656 = vmax.f32 %v1397, 0.0
        %v1657 = vmax.f32 %v1468, 0.0
        %v1658 = vmax.f32 %v1470, 0.0
        %v1659 = vmax.f32 %v1541, 0.0
        %v1660 = vmax.f32 %v1543, 0.0
        %v1661 = vmax.f32 %v1034, 0.0
        %v1662 = vmax.f32 %v1036, 0.0
        %v1663 = vmax.f32 %v1107, 0.0
        %v1664 = vmax.f32 %v1109, 0.0
        %v1665 = vmax.f32 %v1180, 0.0
        %v1666 = vmax.f32 %v1182, 0.0
        %v1667 = vmax.f32 %v1253, 0.0
        %v1668 = vmax.f32 %v1255, 0.0
        %v1669 = vmax.f32 %v1326, 0.0
        %v1670 = vmax.f32 %v1328, 0.0
        %v1671 = vmax.f32 %v1399, 0.0
        %v1672 = vmax.f32 %v1401, 0.0
        %v1673 = vmax.f32 %v1472, 0.0
        %v1674 = vmax.f32 %v1474, 0.0
        %v1675 = vmax.f32 %v1545, 0.0
        %v1676 = vmax.f32 %v1547, 0.0
        %v1677 = vld [vmem:[#allocation2] sm:$0xff]
        %v1678 = vld [vmem:[#allocation2 + $0x8] sm:$0xff]
        %v1679 = vadd.f32 %v1549, %v1565
        %v1680 = vadd.f32 %v1679, %v1581
        %v1681 = vadd.f32 %v1680, %v1597
        %v1682 = vadd.f32 %v1681, %v1613
        %v1683 = vadd.f32 %v1682, %v1629
        %v1684 = vadd.f32 %v1683, %v1645
        %v1685 = vadd.f32 %v1684, %v1661
        %v1686 = vrot.slane %v1685, 4
        %v1687 = vadd.f32 %v1685, %v1686
        %v1688 = vrot.slane %v1687, 2
        %v1689 = vadd.f32 %v1687, %v1688
        %v1690 = vrot.slane %v1689, 1
        %v1691 = vadd.f32 %v1689, %v1690
        %v1692 = vadd.f32 %v1550, %v1566
        %v1693 = vadd.f32 %v1692, %v1582
        %v1694 = vadd.f32 %v1693, %v1598
        %v1695 = vadd.f32 %v1694, %v1614
        %v1696 = vadd.f32 %v1695, %v1630
        %v1697 = vadd.f32 %v1696, %v1646
        %v1698 = vadd.f32 %v1697, %v1662
        %v1699 = vrot.slane %v1698, 4
        %v1700 = vadd.f32 %v1698, %v1699
        %v1701 = vrot.slane %v1700, 2
        %v1702 = vadd.f32 %v1700, %v1701
        %v1703 = vrot.slane %v1702, 1
        %v1704 = vadd.f32 %v1702, %v1703
        %v1705 = vadd.f32 %v1551, %v1567
        %v1706 = vadd.f32 %v1705, %v1583
        %v1707 = vadd.f32 %v1706, %v1599
        %v1708 = vadd.f32 %v1707, %v1615
        %v1709 = vadd.f32 %v1708, %v1631
        %v1710 = vadd.f32 %v1709, %v1647
        %v1711 = vadd.f32 %v1710, %v1663
        %v1712 = vrot.slane %v1711, 4
        %v1713 = vadd.f32 %v1711, %v1712
        %v1714 = vrot.slane %v1713, 2
        %v1715 = vadd.f32 %v1713, %v1714
        %v1716 = vrot.slane %v1715, 1
        %v1717 = vadd.f32 %v1715, %v1716
        %v1718 = vadd.f32 %v1552, %v1568
        %v1719 = vadd.f32 %v1718, %v1584
        %v1720 = vadd.f32 %v1719, %v1600
        %v1721 = vadd.f32 %v1720, %v1616
        %v1722 = vadd.f32 %v1721, %v1632
        %v1723 = vadd.f32 %v1722, %v1648
        %v1724 = vadd.f32 %v1723, %v1664
        %v1725 = vrot.slane %v1724, 4
        %v1726 = vadd.f32 %v1724, %v1725
        %v1727 = vrot.slane %v1726, 2
        %v1728 = vadd.f32 %v1726, %v1727
        %v1729 = vrot.slane %v1728, 1
        %v1730 = vadd.f32 %v1728, %v1729
        %v1731 = vadd.f32 %v1553, %v1569
        %v1732 = vadd.f32 %v1731, %v1585
        %v1733 = vadd.f32 %v1732, %v1601
        %v1734 = vadd.f32 %v1733, %v1617
        %v1735 = vadd.f32 %v1734, %v1633
        %v1736 = vadd.f32 %v1735, %v1649
        %v1737 = vadd.f32 %v1736, %v1665
        %v1738 = vrot.slane %v1737, 4
        %v1739 = vadd.f32 %v1737, %v1738
        %v1740 = vrot.slane %v1739, 2
        %v1741 = vadd.f32 %v1739, %v1740
        %v1742 = vrot.slane %v1741, 1
        %v1743 = vadd.f32 %v1741, %v1742
        %v1744 = vadd.f32 %v1554, %v1570
        %v1745 = vadd.f32 %v1744, %v1586
        %v1746 = vadd.f32 %v1745, %v1602
        %v1747 = vadd.f32 %v1746, %v1618
        %v1748 = vadd.f32 %v1747, %v1634
        %v1749 = vadd.f32 %v1748, %v1650
        %v1750 = vadd.f32 %v1749, %v1666
        %v1751 = vrot.slane %v1750, 4
        %v1752 = vadd.f32 %v1750, %v1751
        %v1753 = vrot.slane %v1752, 2
        %v1754 = vadd.f32 %v1752, %v1753
        %v1755 = vrot.slane %v1754, 1
        %v1756 = vadd.f32 %v1754, %v1755
        %v1757 = vadd.f32 %v1555, %v1571
        %v1758 = vadd.f32 %v1757, %v1587
        %v1759 = vadd.f32 %v1758, %v1603
        %v1760 = vadd.f32 %v1759, %v1619
        %v1761 = vadd.f32 %v1760, %v1635
        %v1762 = vadd.f32 %v1761, %v1651
        %v1763 = vadd.f32 %v1762, %v1667
        %v1764 = vrot.slane %v1763, 4
        %v1765 = vadd.f32 %v1763, %v1764
        %v1766 = vrot.slane %v1765, 2
        %v1767 = vadd.f32 %v1765, %v1766
        %v1768 = vrot.slane %v1767, 1
        %v1769 = vadd.f32 %v1767, %v1768
        %v1770 = vadd.f32 %v1556, %v1572
        %v1771 = vadd.f32 %v1770, %v1588
        %v1772 = vadd.f32 %v1771, %v1604
        %v1773 = vadd.f32 %v1772, %v1620
        %v1774 = vadd.f32 %v1773, %v1636
        %v1775 = vadd.f32 %v1774, %v1652
        %v1776 = vadd.f32 %v1775, %v1668
        %v1777 = vrot.slane %v1776, 4
        %v1778 = vadd.f32 %v1776, %v1777
        %v1779 = vrot.slane %v1778, 2
        %v1780 = vadd.f32 %v1778, %v1779
        %v1781 = vrot.slane %v1780, 1
        %v1782 = vadd.f32 %v1780, %v1781
        %v1783 = vadd.f32 %v1557, %v1573
        %v1784 = vadd.f32 %v1783, %v1589
        %v1785 = vadd.f32 %v1784, %v1605
        %v1786 = vadd.f32 %v1785, %v1621
        %v1787 = vadd.f32 %v1786, %v1637
        %v1788 = vadd.f32 %v1787, %v1653
        %v1789 = vadd.f32 %v1788, %v1669
        %v1790 = vrot.slane %v1789, 4
        %v1791 = vadd.f32 %v1789, %v1790
        %v1792 = vrot.slane %v1791, 2
        %v1793 = vadd.f32 %v1791, %v1792
        %v1794 = vrot.slane %v1793, 1
        %v1795 = vadd.f32 %v1793, %v1794
        %v1796 = vadd.f32 %v1558, %v1574
        %v1797 = vadd.f32 %v1796, %v1590
        %v1798 = vadd.f32 %v1797, %v1606
        %v1799 = vadd.f32 %v1798, %v1622
        %v1800 = vadd.f32 %v1799, %v1638
        %v1801 = vadd.f32 %v1800, %v1654
        %v1802 = vadd.f32 %v1801, %v1670
        %v1803 = vrot.slane %v1802, 4
        %v1804 = vadd.f32 %v1802, %v1803
        %v1805 = vrot.slane %v1804, 2
        %v1806 = vadd.f32 %v1804, %v1805
        %v1807 = vrot.slane %v1806, 1
        %v1808 = vadd.f32 %v1806, %v1807
        %v1809 = vadd.f32 %v1559, %v1575
        %v1810 = vadd.f32 %v1809, %v1591
        %v1811 = vadd.f32 %v1810, %v1607
        %v1812 = vadd.f32 %v1811, %v1623
        %v1813 = vadd.f32 %v1812, %v1639
        %v1814 = vadd.f32 %v1813, %v1655
        %v1815 = vadd.f32 %v1814, %v1671
        %v1816 = vrot.slane %v1815, 4
        %v1817 = vadd.f32 %v1815, %v1816
        %v1818 = vrot.slane %v1817, 2
        %v1819 = vadd.f32 %v1817, %v1818
        %v1820 = vrot.slane %v1819, 1
        %v1821 = vadd.f32 %v1819, %v1820
        %v1822 = vadd.f32 %v1560, %v1576
        %v1823 = vadd.f32 %v1822, %v1592
        %v1824 = vadd.f32 %v1823, %v1608
        %v1825 = vadd.f32 %v1824, %v1624
        %v1826 = vadd.f32 %v1825, %v1640
        %v1827 = vadd.f32 %v1826, %v1656
        %v1828 = vadd.f32 %v1827, %v1672
        %v1829 = vrot.slane %v1828, 4
        %v1830 = vadd.f32 %v1828, %v1829
        %v1831 = vrot.slane %v1830, 2
        %v1832 = vadd.f32 %v1830, %v1831
        %v1833 = vrot.slane %v1832, 1
        %v1834 = vadd.f32 %v1832, %v1833
        %v1835 = vadd.f32 %v1561, %v1577
        %v1836 = vadd.f32 %v1835, %v1593
        %v1837 = vadd.f32 %v1836, %v1609
        %v1838 = vadd.f32 %v1837, %v1625
        %v1839 = vadd.f32 %v1838, %v1641
        %v1840 = vadd.f32 %v1839, %v1657
        %v1841 = vadd.f32 %v1840, %v1673
        %v1842 = vrot.slane %v1841, 4
        %v1843 = vadd.f32 %v1841, %v1842
        %v1844 = vrot.slane %v1843, 2
        %v1845 = vadd.f32 %v1843, %v1844
        %v1846 = vrot.slane %v1845, 1
        %v1847 = vadd.f32 %v1845, %v1846
        %v1848 = vadd.f32 %v1562, %v1578
        %v1849 = vadd.f32 %v1848, %v1594
        %v1850 = vadd.f32 %v1849, %v1610
        %v1851 = vadd.f32 %v1850, %v1626
        %v1852 = vadd.f32 %v1851, %v1642
        %v1853 = vadd.f32 %v1852, %v1658
        %v1854 = vadd.f32 %v1853, %v1674
        %v1855 = vrot.slane %v1854, 4
        %v1856 = vadd.f32 %v1854, %v1855
        %v1857 = vrot.slane %v1856, 2
        %v1858 = vadd.f32 %v1856, %v1857
        %v1859 = vrot.slane %v1858, 1
        %v1860 = vadd.f32 %v1858, %v1859
        %v1861 = vadd.f32 %v1563, %v1579
        %v1862 = vadd.f32 %v1861, %v1595
        %v1863 = vadd.f32 %v1862, %v1611
        %v1864 = vadd.f32 %v1863, %v1627
        %v1865 = vadd.f32 %v1864, %v1643
        %v1866 = vadd.f32 %v1865, %v1659
        %v1867 = vadd.f32 %v1866, %v1675
        %v1868 = vrot.slane %v1867, 4
        %v1869 = vadd.f32 %v1867, %v1868
        %v1870 = vrot.slane %v1869, 2
        %v1871 = vadd.f32 %v1869, %v1870
        %v1872 = vrot.slane %v1871, 1
        %v1873 = vadd.f32 %v1871, %v1872
        %v1874 = vadd.f32 %v1564, %v1580
        %v1875 = vadd.f32 %v1874, %v1596
        %v1876 = vadd.f32 %v1875, %v1612
        %v1877 = vadd.f32 %v1876, %v1628
        %v1878 = vadd.f32 %v1877, %v1644
        %v1879 = vadd.f32 %v1878, %v1660
        %v1880 = vadd.f32 %v1879, %v1676
        %v1881 = vrot.slane %v1880, 4
        %v1882 = vadd.f32 %v1880, %v1881
        %v1883 = vrot.slane %v1882, 2
        %v1884 = vadd.f32 %v1882, %v1883
        %v1885 = vrot.slane %v1884, 1
        %v1886 = vadd.f32 %v1884, %v1885
        %v1903 = vcombine.low %v1691, %v1704
        %v1904 = vcombine.low %v1717, %v1730
        %v1905 = vcombine.low %v1743, %v1756
        %v1906 = vcombine.low %v1769, %v1782
        %v1908 = vunpack.c.l.s4 1966171168
        %v1909 = vunpack.c.0.s8 %v1908
        %v1910 = vlaneseq
        %v1911 = vshrl.u32 %v1910, 7
        %v1912 = vsub.s32 %v1909, %v1911
        %v1913 = vrot.slane %v1903, %v1912
        %v1915 = vunpack.c.l.s4 1966171168
        %v1916 = vunpack.c.0.s8 %v1915
        %v1917 = vlaneseq
        %v1918 = vshrl.u32 %v1917, 7
        %v1919 = vsub.s32 %v1916, %v1918
        %v1920 = vrot.slane %v1904, %v1919
        %v1922 = vunpack.c.l.s4 1966171168
        %v1923 = vunpack.c.0.s8 %v1922
        %v1924 = vlaneseq
        %v1925 = vshrl.u32 %v1924, 7
        %v1926 = vsub.s32 %v1923, %v1925
        %v1927 = vrot.slane %v1905, %v1926
        %v1929 = vunpack.c.l.s4 1966171168
        %v1930 = vunpack.c.0.s8 %v1929
        %v1931 = vlaneseq
        %v1932 = vshrl.u32 %v1931, 7
        %v1933 = vsub.s32 %v1930, %v1932
        %v1934 = vrot.slane %v1906, %v1933
        %v1935 = vcombine.low %v1913, %v1920
        %v1936 = vcombine.low %v1927, %v1934
        %v1938 = vunpack.c.l.s4 1966171168
        %v1939 = vunpack.c.0.s8 %v1938
        %v1940 = vlaneseq
        %v1941 = vshrl.u32 %v1940, 7
        %v1942 = vsub.s32 %v1939, %v1941
        %v1943 = vrot.slane %v1935, %v1942
        %v1945 = vunpack.c.l.s4 1966171168
        %v1946 = vunpack.c.0.s8 %v1945
        %v1947 = vlaneseq
        %v1948 = vshrl.u32 %v1947, 7
        %v1949 = vsub.s32 %v1946, %v1948
        %v1950 = vrot.slane %v1936, %v1949
        %v1951 = vcombine.low %v1943, %v1950
        %v1952 = vcombine.low %v1795, %v1808
        %v1953 = vcombine.low %v1821, %v1834
        %v1954 = vcombine.low %v1847, %v1860
        %v1955 = vcombine.low %v1873, %v1886
        %v1957 = vunpack.c.l.s4 1966171168
        %v1958 = vunpack.c.0.s8 %v1957
        %v1959 = vlaneseq
        %v1960 = vshrl.u32 %v1959, 7
        %v1961 = vsub.s32 %v1958, %v1960
        %v1962 = vrot.slane %v1952, %v1961
        %v1964 = vunpack.c.l.s4 1966171168
        %v1965 = vunpack.c.0.s8 %v1964
        %v1966 = vlaneseq
        %v1967 = vshrl.u32 %v1966, 7
        %v1968 = vsub.s32 %v1965, %v1967
        %v1969 = vrot.slane %v1953, %v1968
        %v1971 = vunpack.c.l.s4 1966171168
        %v1972 = vunpack.c.0.s8 %v1971
        %v1973 = vlaneseq
        %v1974 = vshrl.u32 %v1973, 7
        %v1975 = vsub.s32 %v1972, %v1974
        %v1976 = vrot.slane %v1954, %v1975
        %v1978 = vunpack.c.l.s4 1966171168
        %v1979 = vunpack.c.0.s8 %v1978
        %v1980 = vlaneseq
        %v1981 = vshrl.u32 %v1980, 7
        %v1982 = vsub.s32 %v1979, %v1981
        %v1983 = vrot.slane %v1955, %v1982
        %v1984 = vcombine.low %v1962, %v1969
        %v1985 = vcombine.low %v1976, %v1983
        %v1987 = vunpack.c.l.s4 1966171168
        %v1988 = vunpack.c.0.s8 %v1987
        %v1989 = vlaneseq
        %v1990 = vshrl.u32 %v1989, 7
        %v1991 = vsub.s32 %v1988, %v1990
        %v1992 = vrot.slane %v1984, %v1991
        %v1994 = vunpack.c.l.s4 1966171168
        %v1995 = vunpack.c.0.s8 %v1994
        %v1996 = vlaneseq
        %v1997 = vshrl.u32 %v1996, 7
        %v1998 = vsub.s32 %v1995, %v1997
        %v1999 = vrot.slane %v1985, %v1998
        %v2000 = vcombine.low %v1992, %v1999
        %v2003 = vadd.f32 %v1677, %v1951
        %v2004 = vadd.f32 %v1678, %v2000
        %2005 = vst [vmem:[#allocation2] sm:$0xff] %v2003
        %2006 = vst [vmem:[#allocation2 + $0x8] sm:$0xff] %v2004
        // Predicated region
        $region65: #{tpu_custom_call.1} parent=39 // pred_check
          %p2007 = pneg %p317
        $region66: #{tpu_custom_call.1} parent=39 // pred_check_branch
          %2009 = sbr.rel (%p2007) target = $region68
        $region67: #{tpu_custom_call.1} parent=39 // pred_region
          %v2010 = vld [vmem:[#allocation2] sm:$0xff]
          %v2011 = vld [vmem:[#allocation2 + $0x8] sm:$0xff]
          %v2012 = vmul.f32 %v2010, 0.015625
          %v2013 = vmul.f32 %v2011, 0.015625
          %v2014 = vld [vmem:[#allocation9] sm:$0xff]
          %v2015 = vld [vmem:[#allocation9 + $0x8] sm:$0xff]
          %v2016 = vld [vmem:[#allocation9 + $0x10] sm:$0xff]
          %v2017 = vld [vmem:[#allocation9 + $0x18] sm:$0xff]
          %v2018 = vld [vmem:[#allocation9 + $0x20] sm:$0xff]
          %v2019 = vld [vmem:[#allocation9 + $0x28] sm:$0xff]
          %v2020 = vld [vmem:[#allocation9 + $0x30] sm:$0xff]
          %v2021 = vld [vmem:[#allocation9 + $0x38] sm:$0xff]
          %v2022 = vld [vmem:[#allocation9 + $0x40] sm:$0xff]
          %v2023 = vld [vmem:[#allocation9 + $0x48] sm:$0xff]
          %v2024 = vld [vmem:[#allocation9 + $0x50] sm:$0xff]
          %v2025 = vld [vmem:[#allocation9 + $0x58] sm:$0xff]
          %v2026 = vld [vmem:[#allocation9 + $0x60] sm:$0xff]
          %v2027 = vld [vmem:[#allocation9 + $0x68] sm:$0xff]
          %v2028 = vld [vmem:[#allocation9 + $0x70] sm:$0xff]
          %v2029 = vld [vmem:[#allocation9 + $0x78] sm:$0xff]
          %v2030 = vld [vmem:[#allocation9 + $0x80] sm:$0xff]
          %v2031 = vld [vmem:[#allocation9 + $0x88] sm:$0xff]
          %v2032 = vld [vmem:[#allocation9 + $0x90] sm:$0xff]
          %v2033 = vld [vmem:[#allocation9 + $0x98] sm:$0xff]
          %v2034 = vld [vmem:[#allocation9 + $0xa0] sm:$0xff]
          %v2035 = vld [vmem:[#allocation9 + $0xa8] sm:$0xff]
          %v2036 = vld [vmem:[#allocation9 + $0xb0] sm:$0xff]
          %v2037 = vld [vmem:[#allocation9 + $0xb8] sm:$0xff]
          %v2038 = vld [vmem:[#allocation9 + $0xc0] sm:$0xff]
          %v2039 = vld [vmem:[#allocation9 + $0xc8] sm:$0xff]
          %v2040 = vld [vmem:[#allocation9 + $0xd0] sm:$0xff]
          %v2041 = vld [vmem:[#allocation9 + $0xd8] sm:$0xff]
          %v2042 = vld [vmem:[#allocation9 + $0xe0] sm:$0xff]
          %v2043 = vld [vmem:[#allocation9 + $0xe8] sm:$0xff]
          %v2044 = vld [vmem:[#allocation9 + $0xf0] sm:$0xff]
          %v2045 = vld [vmem:[#allocation9 + $0xf8] sm:$0xff]
          %v2046 = vld [vmem:[#allocation9 + $0x100] sm:$0xff]
          %v2047 = vld [vmem:[#allocation9 + $0x108] sm:$0xff]
          %v2048 = vld [vmem:[#allocation9 + $0x110] sm:$0xff]
          %v2049 = vld [vmem:[#allocation9 + $0x118] sm:$0xff]
          %v2050 = vld [vmem:[#allocation9 + $0x120] sm:$0xff]
          %v2051 = vld [vmem:[#allocation9 + $0x128] sm:$0xff]
          %v2052 = vld [vmem:[#allocation9 + $0x130] sm:$0xff]
          %v2053 = vld [vmem:[#allocation9 + $0x138] sm:$0xff]
          %v2054 = vld [vmem:[#allocation9 + $0x140] sm:$0xff]
          %v2055 = vld [vmem:[#allocation9 + $0x148] sm:$0xff]
          %v2056 = vld [vmem:[#allocation9 + $0x150] sm:$0xff]
          %v2057 = vld [vmem:[#allocation9 + $0x158] sm:$0xff]
          %v2058 = vld [vmem:[#allocation9 + $0x160] sm:$0xff]
          %v2059 = vld [vmem:[#allocation9 + $0x168] sm:$0xff]
          %v2060 = vld [vmem:[#allocation9 + $0x170] sm:$0xff]
          %v2061 = vld [vmem:[#allocation9 + $0x178] sm:$0xff]
          %v2062 = vld [vmem:[#allocation9 + $0x180] sm:$0xff]
          %v2063 = vld [vmem:[#allocation9 + $0x188] sm:$0xff]
          %v2064 = vld [vmem:[#allocation9 + $0x190] sm:$0xff]
          %v2065 = vld [vmem:[#allocation9 + $0x198] sm:$0xff]
          %v2066 = vld [vmem:[#allocation9 + $0x1a0] sm:$0xff]
          %v2067 = vld [vmem:[#allocation9 + $0x1a8] sm:$0xff]
          %v2068 = vld [vmem:[#allocation9 + $0x1b0] sm:$0xff]
          %v2069 = vld [vmem:[#allocation9 + $0x1b8] sm:$0xff]
          %v2070 = vld [vmem:[#allocation9 + $0x1c0] sm:$0xff]
          %v2071 = vld [vmem:[#allocation9 + $0x1c8] sm:$0xff]
          %v2072 = vld [vmem:[#allocation9 + $0x1d0] sm:$0xff]
          %v2073 = vld [vmem:[#allocation9 + $0x1d8] sm:$0xff]
          %v2074 = vld [vmem:[#allocation9 + $0x1e0] sm:$0xff]
          %v2075 = vld [vmem:[#allocation9 + $0x1e8] sm:$0xff]
          %v2076 = vld [vmem:[#allocation9 + $0x1f0] sm:$0xff]
          %v2077 = vld [vmem:[#allocation9 + $0x1f8] sm:$0xff]
          %v2078 = vld [vmem:[#allocation9 + $0x200] sm:$0xff]
          %v2079 = vld [vmem:[#allocation9 + $0x208] sm:$0xff]
          %v2080 = vld [vmem:[#allocation9 + $0x210] sm:$0xff]
          %v2081 = vld [vmem:[#allocation9 + $0x218] sm:$0xff]
          %v2082 = vld [vmem:[#allocation9 + $0x220] sm:$0xff]
          %v2083 = vld [vmem:[#allocation9 + $0x228] sm:$0xff]
          %v2084 = vld [vmem:[#allocation9 + $0x230] sm:$0xff]
          %v2085 = vld [vmem:[#allocation9 + $0x238] sm:$0xff]
          %v2086 = vld [vmem:[#allocation9 + $0x240] sm:$0xff]
          %v2087 = vld [vmem:[#allocation9 + $0x248] sm:$0xff]
          %v2088 = vld [vmem:[#allocation9 + $0x250] sm:$0xff]
          %v2089 = vld [vmem:[#allocation9 + $0x258] sm:$0xff]
          %v2090 = vld [vmem:[#allocation9 + $0x260] sm:$0xff]
          %v2091 = vld [vmem:[#allocation9 + $0x268] sm:$0xff]
          %v2092 = vld [vmem:[#allocation9 + $0x270] sm:$0xff]
          %v2093 = vld [vmem:[#allocation9 + $0x278] sm:$0xff]
          %v2094 = vld [vmem:[#allocation9 + $0x280] sm:$0xff]
          %v2095 = vld [vmem:[#allocation9 + $0x288] sm:$0xff]
          %v2096 = vld [vmem:[#allocation9 + $0x290] sm:$0xff]
          %v2097 = vld [vmem:[#allocation9 + $0x298] sm:$0xff]
          %v2098 = vld [vmem:[#allocation9 + $0x2a0] sm:$0xff]
          %v2099 = vld [vmem:[#allocation9 + $0x2a8] sm:$0xff]
          %v2100 = vld [vmem:[#allocation9 + $0x2b0] sm:$0xff]
          %v2101 = vld [vmem:[#allocation9 + $0x2b8] sm:$0xff]
          %v2102 = vld [vmem:[#allocation9 + $0x2c0] sm:$0xff]
          %v2103 = vld [vmem:[#allocation9 + $0x2c8] sm:$0xff]
          %v2104 = vld [vmem:[#allocation9 + $0x2d0] sm:$0xff]
          %v2105 = vld [vmem:[#allocation9 + $0x2d8] sm:$0xff]
          %v2106 = vld [vmem:[#allocation9 + $0x2e0] sm:$0xff]
          %v2107 = vld [vmem:[#allocation9 + $0x2e8] sm:$0xff]
          %v2108 = vld [vmem:[#allocation9 + $0x2f0] sm:$0xff]
          %v2109 = vld [vmem:[#allocation9 + $0x2f8] sm:$0xff]
          %v2110 = vld [vmem:[#allocation9 + $0x300] sm:$0xff]
          %v2111 = vld [vmem:[#allocation9 + $0x308] sm:$0xff]
          %v2112 = vld [vmem:[#allocation9 + $0x310] sm:$0xff]
          %v2113 = vld [vmem:[#allocation9 + $0x318] sm:$0xff]
          %v2114 = vld [vmem:[#allocation9 + $0x320] sm:$0xff]
          %v2115 = vld [vmem:[#allocation9 + $0x328] sm:$0xff]
          %v2116 = vld [vmem:[#allocation9 + $0x330] sm:$0xff]
          %v2117 = vld [vmem:[#allocation9 + $0x338] sm:$0xff]
          %v2118 = vld [vmem:[#allocation9 + $0x340] sm:$0xff]
          %v2119 = vld [vmem:[#allocation9 + $0x348] sm:$0xff]
          %v2120 = vld [vmem:[#allocation9 + $0x350] sm:$0xff]
          %v2121 = vld [vmem:[#allocation9 + $0x358] sm:$0xff]
          %v2122 = vld [vmem:[#allocation9 + $0x360] sm:$0xff]
          %v2123 = vld [vmem:[#allocation9 + $0x368] sm:$0xff]
          %v2124 = vld [vmem:[#allocation9 + $0x370] sm:$0xff]
          %v2125 = vld [vmem:[#allocation9 + $0x378] sm:$0xff]
          %v2126 = vld [vmem:[#allocation9 + $0x380] sm:$0xff]
          %v2127 = vld [vmem:[#allocation9 + $0x388] sm:$0xff]
          %v2128 = vld [vmem:[#allocation9 + $0x390] sm:$0xff]
          %v2129 = vld [vmem:[#allocation9 + $0x398] sm:$0xff]
          %v2130 = vld [vmem:[#allocation9 + $0x3a0] sm:$0xff]
          %v2131 = vld [vmem:[#allocation9 + $0x3a8] sm:$0xff]
          %v2132 = vld [vmem:[#allocation9 + $0x3b0] sm:$0xff]
          %v2133 = vld [vmem:[#allocation9 + $0x3b8] sm:$0xff]
          %v2134 = vld [vmem:[#allocation9 + $0x3c0] sm:$0xff]
          %v2135 = vld [vmem:[#allocation9 + $0x3c8] sm:$0xff]
          %v2136 = vld [vmem:[#allocation9 + $0x3d0] sm:$0xff]
          %v2137 = vld [vmem:[#allocation9 + $0x3d8] sm:$0xff]
          %v2138 = vld [vmem:[#allocation9 + $0x3e0] sm:$0xff]
          %v2139 = vld [vmem:[#allocation9 + $0x3e8] sm:$0xff]
          %v2140 = vld [vmem:[#allocation9 + $0x3f0] sm:$0xff]
          %v2141 = vld [vmem:[#allocation9 + $0x3f8] sm:$0xff]
          %v2142 = vld [vmem:[#allocation9 + $0x400] sm:$0xff]
          %v2143 = vld [vmem:[#allocation9 + $0x408] sm:$0xff]
          %v2144 = vld [vmem:[#allocation9 + $0x410] sm:$0xff]
          %v2145 = vld [vmem:[#allocation9 + $0x418] sm:$0xff]
          %v2146 = vld [vmem:[#allocation9 + $0x420] sm:$0xff]
          %v2147 = vld [vmem:[#allocation9 + $0x428] sm:$0xff]
          %v2148 = vld [vmem:[#allocation9 + $0x430] sm:$0xff]
          %v2149 = vld [vmem:[#allocation9 + $0x438] sm:$0xff]
          %v2150 = vld [vmem:[#allocation9 + $0x440] sm:$0xff]
          %v2151 = vld [vmem:[#allocation9 + $0x448] sm:$0xff]
          %v2152 = vld [vmem:[#allocation9 + $0x450] sm:$0xff]
          %v2153 = vld [vmem:[#allocation9 + $0x458] sm:$0xff]
          %v2154 = vld [vmem:[#allocation9 + $0x460] sm:$0xff]
          %v2155 = vld [vmem:[#allocation9 + $0x468] sm:$0xff]
          %v2156 = vld [vmem:[#allocation9 + $0x470] sm:$0xff]
          %v2157 = vld [vmem:[#allocation9 + $0x478] sm:$0xff]
          %v2158 = vld [vmem:[#allocation9 + $0x480] sm:$0xff]
          %v2159 = vld [vmem:[#allocation9 + $0x488] sm:$0xff]
          %v2160 = vld [vmem:[#allocation9 + $0x490] sm:$0xff]
          %v2161 = vld [vmem:[#allocation9 + $0x498] sm:$0xff]
          %v2162 = vld [vmem:[#allocation9 + $0x4a0] sm:$0xff]
          %v2163 = vld [vmem:[#allocation9 + $0x4a8] sm:$0xff]
          %v2164 = vld [vmem:[#allocation9 + $0x4b0] sm:$0xff]
          %v2165 = vld [vmem:[#allocation9 + $0x4b8] sm:$0xff]
          %v2166 = vld [vmem:[#allocation9 + $0x4c0] sm:$0xff]
          %v2167 = vld [vmem:[#allocation9 + $0x4c8] sm:$0xff]
          %v2168 = vld [vmem:[#allocation9 + $0x4d0] sm:$0xff]
          %v2169 = vld [vmem:[#allocation9 + $0x4d8] sm:$0xff]
          %v2170 = vld [vmem:[#allocation9 + $0x4e0] sm:$0xff]
          %v2171 = vld [vmem:[#allocation9 + $0x4e8] sm:$0xff]
          %v2172 = vld [vmem:[#allocation9 + $0x4f0] sm:$0xff]
          %v2173 = vld [vmem:[#allocation9 + $0x4f8] sm:$0xff]
          %v2174 = vld [vmem:[#allocation9 + $0x500] sm:$0xff]
          %v2175 = vld [vmem:[#allocation9 + $0x508] sm:$0xff]
          %v2176 = vld [vmem:[#allocation9 + $0x510] sm:$0xff]
          %v2177 = vld [vmem:[#allocation9 + $0x518] sm:$0xff]
          %v2178 = vld [vmem:[#allocation9 + $0x520] sm:$0xff]
          %v2179 = vld [vmem:[#allocation9 + $0x528] sm:$0xff]
          %v2180 = vld [vmem:[#allocation9 + $0x530] sm:$0xff]
          %v2181 = vld [vmem:[#allocation9 + $0x538] sm:$0xff]
          %v2182 = vld [vmem:[#allocation9 + $0x540] sm:$0xff]
          %v2183 = vld [vmem:[#allocation9 + $0x548] sm:$0xff]
          %v2184 = vld [vmem:[#allocation9 + $0x550] sm:$0xff]
          %v2185 = vld [vmem:[#allocation9 + $0x558] sm:$0xff]
          %v2186 = vld [vmem:[#allocation9 + $0x560] sm:$0xff]
          %v2187 = vld [vmem:[#allocation9 + $0x568] sm:$0xff]
          %v2188 = vld [vmem:[#allocation9 + $0x570] sm:$0xff]
          %v2189 = vld [vmem:[#allocation9 + $0x578] sm:$0xff]
          %v2190 = vld [vmem:[#allocation9 + $0x580] sm:$0xff]
          %v2191 = vld [vmem:[#allocation9 + $0x588] sm:$0xff]
          %v2192 = vld [vmem:[#allocation9 + $0x590] sm:$0xff]
          %v2193 = vld [vmem:[#allocation9 + $0x598] sm:$0xff]
          %v2194 = vld [vmem:[#allocation9 + $0x5a0] sm:$0xff]
          %v2195 = vld [vmem:[#allocation9 + $0x5a8] sm:$0xff]
          %v2196 = vld [vmem:[#allocation9 + $0x5b0] sm:$0xff]
          %v2197 = vld [vmem:[#allocation9 + $0x5b8] sm:$0xff]
          %v2198 = vld [vmem:[#allocation9 + $0x5c0] sm:$0xff]
          %v2199 = vld [vmem:[#allocation9 + $0x5c8] sm:$0xff]
          %v2200 = vld [vmem:[#allocation9 + $0x5d0] sm:$0xff]
          %v2201 = vld [vmem:[#allocation9 + $0x5d8] sm:$0xff]
          %v2202 = vld [vmem:[#allocation9 + $0x5e0] sm:$0xff]
          %v2203 = vld [vmem:[#allocation9 + $0x5e8] sm:$0xff]
          %v2204 = vld [vmem:[#allocation9 + $0x5f0] sm:$0xff]
          %v2205 = vld [vmem:[#allocation9 + $0x5f8] sm:$0xff]
          %v2206 = vld [vmem:[#allocation9 + $0x600] sm:$0xff]
          %v2207 = vld [vmem:[#allocation9 + $0x608] sm:$0xff]
          %v2208 = vld [vmem:[#allocation9 + $0x610] sm:$0xff]
          %v2209 = vld [vmem:[#allocation9 + $0x618] sm:$0xff]
          %v2210 = vld [vmem:[#allocation9 + $0x620] sm:$0xff]
          %v2211 = vld [vmem:[#allocation9 + $0x628] sm:$0xff]
          %v2212 = vld [vmem:[#allocation9 + $0x630] sm:$0xff]
          %v2213 = vld [vmem:[#allocation9 + $0x638] sm:$0xff]
          %v2214 = vld [vmem:[#allocation9 + $0x640] sm:$0xff]
          %v2215 = vld [vmem:[#allocation9 + $0x648] sm:$0xff]
          %v2216 = vld [vmem:[#allocation9 + $0x650] sm:$0xff]
          %v2217 = vld [vmem:[#allocation9 + $0x658] sm:$0xff]
          %v2218 = vld [vmem:[#allocation9 + $0x660] sm:$0xff]
          %v2219 = vld [vmem:[#allocation9 + $0x668] sm:$0xff]
          %v2220 = vld [vmem:[#allocation9 + $0x670] sm:$0xff]
          %v2221 = vld [vmem:[#allocation9 + $0x678] sm:$0xff]
          %v2222 = vld [vmem:[#allocation9 + $0x680] sm:$0xff]
          %v2223 = vld [vmem:[#allocation9 + $0x688] sm:$0xff]
          %v2224 = vld [vmem:[#allocation9 + $0x690] sm:$0xff]
          %v2225 = vld [vmem:[#allocation9 + $0x698] sm:$0xff]
          %v2226 = vld [vmem:[#allocation9 + $0x6a0] sm:$0xff]
          %v2227 = vld [vmem:[#allocation9 + $0x6a8] sm:$0xff]
          %v2228 = vld [vmem:[#allocation9 + $0x6b0] sm:$0xff]
          %v2229 = vld [vmem:[#allocation9 + $0x6b8] sm:$0xff]
          %v2230 = vld [vmem:[#allocation9 + $0x6c0] sm:$0xff]
          %v2231 = vld [vmem:[#allocation9 + $0x6c8] sm:$0xff]
          %v2232 = vld [vmem:[#allocation9 + $0x6d0] sm:$0xff]
          %v2233 = vld [vmem:[#allocation9 + $0x6d8] sm:$0xff]
          %v2234 = vld [vmem:[#allocation9 + $0x6e0] sm:$0xff]
          %v2235 = vld [vmem:[#allocation9 + $0x6e8] sm:$0xff]
          %v2236 = vld [vmem:[#allocation9 + $0x6f0] sm:$0xff]
          %v2237 = vld [vmem:[#allocation9 + $0x6f8] sm:$0xff]
          %v2238 = vld [vmem:[#allocation9 + $0x700] sm:$0xff]
          %v2239 = vld [vmem:[#allocation9 + $0x708] sm:$0xff]
          %v2240 = vld [vmem:[#allocation9 + $0x710] sm:$0xff]
          %v2241 = vld [vmem:[#allocation9 + $0x718] sm:$0xff]
          %v2242 = vld [vmem:[#allocation9 + $0x720] sm:$0xff]
          %v2243 = vld [vmem:[#allocation9 + $0x728] sm:$0xff]
          %v2244 = vld [vmem:[#allocation9 + $0x730] sm:$0xff]
          %v2245 = vld [vmem:[#allocation9 + $0x738] sm:$0xff]
          %v2246 = vld [vmem:[#allocation9 + $0x740] sm:$0xff]
          %v2247 = vld [vmem:[#allocation9 + $0x748] sm:$0xff]
          %v2248 = vld [vmem:[#allocation9 + $0x750] sm:$0xff]
          %v2249 = vld [vmem:[#allocation9 + $0x758] sm:$0xff]
          %v2250 = vld [vmem:[#allocation9 + $0x760] sm:$0xff]
          %v2251 = vld [vmem:[#allocation9 + $0x768] sm:$0xff]
          %v2252 = vld [vmem:[#allocation9 + $0x770] sm:$0xff]
          %v2253 = vld [vmem:[#allocation9 + $0x778] sm:$0xff]
          %v2254 = vld [vmem:[#allocation9 + $0x780] sm:$0xff]
          %v2255 = vld [vmem:[#allocation9 + $0x788] sm:$0xff]
          %v2256 = vld [vmem:[#allocation9 + $0x790] sm:$0xff]
          %v2257 = vld [vmem:[#allocation9 + $0x798] sm:$0xff]
          %v2258 = vld [vmem:[#allocation9 + $0x7a0] sm:$0xff]
          %v2259 = vld [vmem:[#allocation9 + $0x7a8] sm:$0xff]
          %v2260 = vld [vmem:[#allocation9 + $0x7b0] sm:$0xff]
          %v2261 = vld [vmem:[#allocation9 + $0x7b8] sm:$0xff]
          %v2262 = vld [vmem:[#allocation9 + $0x7c0] sm:$0xff]
          %v2263 = vld [vmem:[#allocation9 + $0x7c8] sm:$0xff]
          %v2264 = vld [vmem:[#allocation9 + $0x7d0] sm:$0xff]
          %v2265 = vld [vmem:[#allocation9 + $0x7d8] sm:$0xff]
          %v2266 = vld [vmem:[#allocation9 + $0x7e0] sm:$0xff]
          %v2267 = vld [vmem:[#allocation9 + $0x7e8] sm:$0xff]
          %v2268 = vld [vmem:[#allocation9 + $0x7f0] sm:$0xff]
          %v2269 = vld [vmem:[#allocation9 + $0x7f8] sm:$0xff]
          %v2270 = vld [vmem:[#allocation11] sm:$0x1]
          %v2273 = vlaneseq
          %v2274 = vshrl.u32 %v2273, 7
          %v2275 = vsub.s32 0, %v2274
          %v2276 = vrot.slane %v2012, %v2275
          %v2277 = vlaneseq
          %v2278 = vshrl.u32 %v2277, 7
          %v2279 = vsub.s32 1, %v2278
          %v2280 = vrot.slane %v2012, %v2279
          %v2281 = vlaneseq
          %v2282 = vshrl.u32 %v2281, 7
          %v2283 = vsub.s32 2, %v2282
          %v2284 = vrot.slane %v2012, %v2283
          %v2285 = vlaneseq
          %v2286 = vshrl.u32 %v2285, 7
          %v2287 = vsub.s32 3, %v2286
          %v2288 = vrot.slane %v2012, %v2287
          %v2289 = vlaneseq
          %v2290 = vshrl.u32 %v2289, 7
          %v2291 = vsub.s32 4, %v2290
          %v2292 = vrot.slane %v2012, %v2291
          %v2293 = vlaneseq
          %v2294 = vshrl.u32 %v2293, 7
          %v2295 = vsub.s32 5, %v2294
          %v2296 = vrot.slane %v2012, %v2295
          %v2297 = vlaneseq
          %v2298 = vshrl.u32 %v2297, 7
          %v2299 = vsub.s32 6, %v2298
          %v2300 = vrot.slane %v2012, %v2299
          %v2301 = vlaneseq
          %v2302 = vshrl.u32 %v2301, 7
          %v2303 = vsub.s32 7, %v2302
          %v2304 = vrot.slane %v2012, %v2303
          %v2305 = vlaneseq
          %v2306 = vshrl.u32 %v2305, 7
          %v2307 = vsub.s32 0, %v2306
          %v2308 = vrot.slane %v2013, %v2307
          %v2309 = vlaneseq
          %v2310 = vshrl.u32 %v2309, 7
          %v2311 = vsub.s32 1, %v2310
          %v2312 = vrot.slane %v2013, %v2311
          %v2313 = vlaneseq
          %v2314 = vshrl.u32 %v2313, 7
          %v2315 = vsub.s32 2, %v2314
          %v2316 = vrot.slane %v2013, %v2315
          %v2317 = vlaneseq
          %v2318 = vshrl.u32 %v2317, 7
          %v2319 = vsub.s32 3, %v2318
          %v2320 = vrot.slane %v2013, %v2319
          %v2321 = vlaneseq
          %v2322 = vshrl.u32 %v2321, 7
          %v2323 = vsub.s32 4, %v2322
          %v2324 = vrot.slane %v2013, %v2323
          %v2325 = vlaneseq
          %v2326 = vshrl.u32 %v2325, 7
          %v2327 = vsub.s32 5, %v2326
          %v2328 = vrot.slane %v2013, %v2327
          %v2329 = vlaneseq
          %v2330 = vshrl.u32 %v2329, 7
          %v2331 = vsub.s32 6, %v2330
          %v2332 = vrot.slane %v2013, %v2331
          %v2333 = vlaneseq
          %v2334 = vshrl.u32 %v2333, 7
          %v2335 = vsub.s32 7, %v2334
          %v2336 = vrot.slane %v2013, %v2335
          %2353 = vmatprep.subr.mxu0 0.0
          %2354 = vmatpush1.msra.mxu0 %v2014
          %2355 = vmatprep.subr.mxu0 0.0
          %2356 = vmatpush1.msra.mxu0 %v2015
          %2357 = vmatprep.subr.mxu0 0.0
          %2358 = vmatpush1.msra.mxu0 %v2016
          %2359 = vmatprep.subr.mxu0 0.0
          %2360 = vmatpush1.msra.mxu0 %v2017
          %2361 = vmatprep.subr.mxu0 0.0
          %2362 = vmatpush1.msra.mxu0 %v2018
          %2363 = vmatprep.subr.mxu0 0.0
          %2364 = vmatpush1.msra.mxu0 %v2019
          %2365 = vmatprep.subr.mxu0 0.0
          %2366 = vmatpush1.msra.mxu0 %v2020
          %2367 = vmatprep.subr.mxu0 0.0
          %2368 = vmatpush1.msra.mxu0 %v2021
          %2369 = vmatprep.subr.mxu0 0.0
          %2370 = vmatpush1.msra.mxu0 %v2022
          %2371 = vmatprep.subr.mxu0 0.0
          %2372 = vmatpush1.msra.mxu0 %v2023
          %2373 = vmatprep.subr.mxu0 0.0
          %2374 = vmatpush1.msra.mxu0 %v2024
          %2375 = vmatprep.subr.mxu0 0.0
          %2376 = vmatpush1.msra.mxu0 %v2025
          %2377 = vmatprep.subr.mxu0 0.0
          %2378 = vmatpush1.msra.mxu0 %v2026
          %2379 = vmatprep.subr.mxu0 0.0
          %2380 = vmatpush1.msra.mxu0 %v2027
          %2381 = vmatprep.subr.mxu0 0.0
          %2382 = vmatpush1.msra.mxu0 %v2028
          %2383 = vmatprep.subr.mxu0 0.0
          %2384 = vmatpush1.msra.mxu0 %v2029
          %2385 = vmatprep.subr.mxu0 0.0
          %2386 = vmatpush1.msra.mxu0 %v2030
          %2387 = vmatprep.subr.mxu0 0.0
          %2388 = vmatpush1.msra.mxu0 %v2031
          %2389 = vmatprep.subr.mxu0 0.0
          %2390 = vmatpush1.msra.mxu0 %v2032
          %2391 = vmatprep.subr.mxu0 0.0
          %2392 = vmatpush1.msra.mxu0 %v2033
          %2393 = vmatprep.subr.mxu0 0.0
          %2394 = vmatpush1.msra.mxu0 %v2034
          %2395 = vmatprep.subr.mxu0 0.0
          %2396 = vmatpush1.msra.mxu0 %v2035
          %2397 = vmatprep.subr.mxu0 0.0
          %2398 = vmatpush1.msra.mxu0 %v2036
          %2399 = vmatprep.subr.mxu0 0.0
          %2400 = vmatpush1.msra.mxu0 %v2037
          %2401 = vmatprep.subr.mxu0 0.0
          %2402 = vmatpush1.msra.mxu0 %v2038
          %2403 = vmatprep.subr.mxu0 0.0
          %2404 = vmatpush1.msra.mxu0 %v2039
          %2405 = vmatprep.subr.mxu0 0.0
          %2406 = vmatpush1.msra.mxu0 %v2040
          %2407 = vmatprep.subr.mxu0 0.0
          %2408 = vmatpush1.msra.mxu0 %v2041
          %2409 = vmatprep.subr.mxu0 0.0
          %2410 = vmatpush1.msra.mxu0 %v2042
          %2411 = vmatprep.subr.mxu0 0.0
          %2412 = vmatpush1.msra.mxu0 %v2043
          %2413 = vmatprep.subr.mxu0 0.0
          %2414 = vmatpush1.msra.mxu0 %v2044
          %2415 = vmatprep.subr.mxu0 0.0
          %2416 = vmatpush1.msra.mxu0 %v2045
          %2417 = vmatprep.mubr.f32.mxu0 %v2280
          %2418 = vmatmul.mubr.f32.gmra.mrb[0].mxu0 %v2276
          %v2419 = vpop.f32.mrb[0].mxu0
          %v2420 = vadd.f32 %v2270, %v2419
          %v2421 = vpop.f32.mrb[0].mxu0
          %2422 = vdwg.mxu0
          %2423 = vmatprep.subr.mxu0 0.0
          %2424 = vmatpush1.msra.mxu0 %v2046
          %2425 = vmatprep.subr.mxu0 0.0
          %2426 = vmatpush1.msra.mxu0 %v2047
          %2427 = vmatprep.subr.mxu0 0.0
          %2428 = vmatpush1.msra.mxu0 %v2048
          %2429 = vmatprep.subr.mxu0 0.0
          %2430 = vmatpush1.msra.mxu0 %v2049
          %2431 = vmatprep.subr.mxu0 0.0
          %2432 = vmatpush1.msra.mxu0 %v2050
          %2433 = vmatprep.subr.mxu0 0.0
          %2434 = vmatpush1.msra.mxu0 %v2051
          %2435 = vmatprep.subr.mxu0 0.0
          %2436 = vmatpush1.msra.mxu0 %v2052
          %2437 = vmatprep.subr.mxu0 0.0
          %2438 = vmatpush1.msra.mxu0 %v2053
          %2439 = vmatprep.subr.mxu0 0.0
          %2440 = vmatpush1.msra.mxu0 %v2054
          %2441 = vmatprep.subr.mxu0 0.0
          %2442 = vmatpush1.msra.mxu0 %v2055
          %2443 = vmatprep.subr.mxu0 0.0
          %2444 = vmatpush1.msra.mxu0 %v2056
          %2445 = vmatprep.subr.mxu0 0.0
          %2446 = vmatpush1.msra.mxu0 %v2057
          %2447 = vmatprep.subr.mxu0 0.0
          %2448 = vmatpush1.msra.mxu0 %v2058
          %2449 = vmatprep.subr.mxu0 0.0
          %2450 = vmatpush1.msra.mxu0 %v2059
          %2451 = vmatprep.subr.mxu0 0.0
          %2452 = vmatpush1.msra.mxu0 %v2060
          %2453 = vmatprep.subr.mxu0 0.0
          %2454 = vmatpush1.msra.mxu0 %v2061
          %2455 = vmatprep.subr.mxu0 0.0
          %2456 = vmatpush1.msra.mxu0 %v2062
          %2457 = vmatprep.subr.mxu0 0.0
          %2458 = vmatpush1.msra.mxu0 %v2063
          %2459 = vmatprep.subr.mxu0 0.0
          %2460 = vmatpush1.msra.mxu0 %v2064
          %2461 = vmatprep.subr.mxu0 0.0
          %2462 = vmatpush1.msra.mxu0 %v2065
          %2463 = vmatprep.subr.mxu0 0.0
          %2464 = vmatpush1.msra.mxu0 %v2066
          %2465 = vmatprep.subr.mxu0 0.0
          %2466 = vmatpush1.msra.mxu0 %v2067
          %2467 = vmatprep.subr.mxu0 0.0
          %2468 = vmatpush1.msra.mxu0 %v2068
          %2469 = vmatprep.subr.mxu0 0.0
          %2470 = vmatpush1.msra.mxu0 %v2069
          %2471 = vmatprep.subr.mxu0 0.0
          %2472 = vmatpush1.msra.mxu0 %v2070
          %2473 = vmatprep.subr.mxu0 0.0
          %2474 = vmatpush1.msra.mxu0 %v2071
          %2475 = vmatprep.subr.mxu0 0.0
          %2476 = vmatpush1.msra.mxu0 %v2072
          %2477 = vmatprep.subr.mxu0 0.0
          %2478 = vmatpush1.msra.mxu0 %v2073
          %2479 = vmatprep.subr.mxu0 0.0
          %2480 = vmatpush1.msra.mxu0 %v2074
          %2481 = vmatprep.subr.mxu0 0.0
          %2482 = vmatpush1.msra.mxu0 %v2075
          %2483 = vmatprep.subr.mxu0 0.0
          %2484 = vmatpush1.msra.mxu0 %v2076
          %2485 = vmatprep.subr.mxu0 0.0
          %2486 = vmatpush1.msra.mxu0 %v2077
          %2487 = vmatprep.mubr.f32.mxu0 %v2288
          %2488 = vmatmul.mubr.f32.gmra.mrb[0].mxu0 %v2284
          %v2489 = vpop.f32.mrb[0].mxu0
          %v2490 = vadd.f32 %v2420, %v2489
          %v2491 = vpop.f32.mrb[0].mxu0
          %2492 = vdwg.mxu0
          %2493 = vmatprep.subr.mxu0 0.0
          %2494 = vmatpush1.msra.mxu0 %v2078
          %2495 = vmatprep.subr.mxu0 0.0
          %2496 = vmatpush1.msra.mxu0 %v2079
          %2497 = vmatprep.subr.mxu0 0.0
          %2498 = vmatpush1.msra.mxu0 %v2080
          %2499 = vmatprep.subr.mxu0 0.0
          %2500 = vmatpush1.msra.mxu0 %v2081
          %2501 = vmatprep.subr.mxu0 0.0
          %2502 = vmatpush1.msra.mxu0 %v2082
          %2503 = vmatprep.subr.mxu0 0.0
          %2504 = vmatpush1.msra.mxu0 %v2083
          %2505 = vmatprep.subr.mxu0 0.0
          %2506 = vmatpush1.msra.mxu0 %v2084
          %2507 = vmatprep.subr.mxu0 0.0
          %2508 = vmatpush1.msra.mxu0 %v2085
          %2509 = vmatprep.subr.mxu0 0.0
          %2510 = vmatpush1.msra.mxu0 %v2086
          %2511 = vmatprep.subr.mxu0 0.0
          %2512 = vmatpush1.msra.mxu0 %v2087
          %2513 = vmatprep.subr.mxu0 0.0
          %2514 = vmatpush1.msra.mxu0 %v2088
          %2515 = vmatprep.subr.mxu0 0.0
          %2516 = vmatpush1.msra.mxu0 %v2089
          %2517 = vmatprep.subr.mxu0 0.0
          %2518 = vmatpush1.msra.mxu0 %v2090
          %2519 = vmatprep.subr.mxu0 0.0
          %2520 = vmatpush1.msra.mxu0 %v2091
          %2521 = vmatprep.subr.mxu0 0.0
          %2522 = vmatpush1.msra.mxu0 %v2092
          %2523 = vmatprep.subr.mxu0 0.0
          %2524 = vmatpush1.msra.mxu0 %v2093
          %2525 = vmatprep.subr.mxu0 0.0
          %2526 = vmatpush1.msra.mxu0 %v2094
          %2527 = vmatprep.subr.mxu0 0.0
          %2528 = vmatpush1.msra.mxu0 %v2095
          %2529 = vmatprep.subr.mxu0 0.0
          %2530 = vmatpush1.msra.mxu0 %v2096
          %2531 = vmatprep.subr.mxu0 0.0
          %2532 = vmatpush1.msra.mxu0 %v2097
          %2533 = vmatprep.subr.mxu0 0.0
          %2534 = vmatpush1.msra.mxu0 %v2098
          %2535 = vmatprep.subr.mxu0 0.0
          %2536 = vmatpush1.msra.mxu0 %v2099
          %2537 = vmatprep.subr.mxu0 0.0
          %2538 = vmatpush1.msra.mxu0 %v2100
          %2539 = vmatprep.subr.mxu0 0.0
          %2540 = vmatpush1.msra.mxu0 %v2101
          %2541 = vmatprep.subr.mxu0 0.0
          %2542 = vmatpush1.msra.mxu0 %v2102
          %2543 = vmatprep.subr.mxu0 0.0
          %2544 = vmatpush1.msra.mxu0 %v2103
          %2545 = vmatprep.subr.mxu0 0.0
          %2546 = vmatpush1.msra.mxu0 %v2104
          %2547 = vmatprep.subr.mxu0 0.0
          %2548 = vmatpush1.msra.mxu0 %v2105
          %2549 = vmatprep.subr.mxu0 0.0
          %2550 = vmatpush1.msra.mxu0 %v2106
          %2551 = vmatprep.subr.mxu0 0.0
          %2552 = vmatpush1.msra.mxu0 %v2107
          %2553 = vmatprep.subr.mxu0 0.0
          %2554 = vmatpush1.msra.mxu0 %v2108
          %2555 = vmatprep.subr.mxu0 0.0
          %2556 = vmatpush1.msra.mxu0 %v2109
          %2557 = vmatprep.mubr.f32.mxu0 %v2296
          %2558 = vmatmul.mubr.f32.gmra.mrb[0].mxu0 %v2292
          %v2559 = vpop.f32.mrb[0].mxu0
          %v2560 = vadd.f32 %v2490, %v2559
          %v2561 = vpop.f32.mrb[0].mxu0
          %2562 = vdwg.mxu0
          %2563 = vmatprep.subr.mxu0 0.0
          %2564 = vmatpush1.msra.mxu0 %v2110
          %2565 = vmatprep.subr.mxu0 0.0
          %2566 = vmatpush1.msra.mxu0 %v2111
          %2567 = vmatprep.subr.mxu0 0.0
          %2568 = vmatpush1.msra.mxu0 %v2112
          %2569 = vmatprep.subr.mxu0 0.0
          %2570 = vmatpush1.msra.mxu0 %v2113
          %2571 = vmatprep.subr.mxu0 0.0
          %2572 = vmatpush1.msra.mxu0 %v2114
          %2573 = vmatprep.subr.mxu0 0.0
          %2574 = vmatpush1.msra.mxu0 %v2115
          %2575 = vmatprep.subr.mxu0 0.0
          %2576 = vmatpush1.msra.mxu0 %v2116
          %2577 = vmatprep.subr.mxu0 0.0
          %2578 = vmatpush1.msra.mxu0 %v2117
          %2579 = vmatprep.subr.mxu0 0.0
          %2580 = vmatpush1.msra.mxu0 %v2118
          %2581 = vmatprep.subr.mxu0 0.0
          %2582 = vmatpush1.msra.mxu0 %v2119
          %2583 = vmatprep.subr.mxu0 0.0
          %2584 = vmatpush1.msra.mxu0 %v2120
          %2585 = vmatprep.subr.mxu0 0.0
          %2586 = vmatpush1.msra.mxu0 %v2121
          %2587 = vmatprep.subr.mxu0 0.0
          %2588 = vmatpush1.msra.mxu0 %v2122
          %2589 = vmatprep.subr.mxu0 0.0
          %2590 = vmatpush1.msra.mxu0 %v2123
          %2591 = vmatprep.subr.mxu0 0.0
          %2592 = vmatpush1.msra.mxu0 %v2124
          %2593 = vmatprep.subr.mxu0 0.0
          %2594 = vmatpush1.msra.mxu0 %v2125
          %2595 = vmatprep.subr.mxu0 0.0
          %2596 = vmatpush1.msra.mxu0 %v2126
          %2597 = vmatprep.subr.mxu0 0.0
          %2598 = vmatpush1.msra.mxu0 %v2127
          %2599 = vmatprep.subr.mxu0 0.0
          %2600 = vmatpush1.msra.mxu0 %v2128
          %2601 = vmatprep.subr.mxu0 0.0
          %2602 = vmatpush1.msra.mxu0 %v2129
          %2603 = vmatprep.subr.mxu0 0.0
          %2604 = vmatpush1.msra.mxu0 %v2130
          %2605 = vmatprep.subr.mxu0 0.0
          %2606 = vmatpush1.msra.mxu0 %v2131
          %2607 = vmatprep.subr.mxu0 0.0
          %2608 = vmatpush1.msra.mxu0 %v2132
          %2609 = vmatprep.subr.mxu0 0.0
          %2610 = vmatpush1.msra.mxu0 %v2133
          %2611 = vmatprep.subr.mxu0 0.0
          %2612 = vmatpush1.msra.mxu0 %v2134
          %2613 = vmatprep.subr.mxu0 0.0
          %2614 = vmatpush1.msra.mxu0 %v2135
          %2615 = vmatprep.subr.mxu0 0.0
          %2616 = vmatpush1.msra.mxu0 %v2136
          %2617 = vmatprep.subr.mxu0 0.0
          %2618 = vmatpush1.msra.mxu0 %v2137
          %2619 = vmatprep.subr.mxu0 0.0
          %2620 = vmatpush1.msra.mxu0 %v2138
          %2621 = vmatprep.subr.mxu0 0.0
          %2622 = vmatpush1.msra.mxu0 %v2139
          %2623 = vmatprep.subr.mxu0 0.0
          %2624 = vmatpush1.msra.mxu0 %v2140
          %2625 = vmatprep.subr.mxu0 0.0
          %2626 = vmatpush1.msra.mxu0 %v2141
          %2627 = vmatprep.mubr.f32.mxu0 %v2304
          %2628 = vmatmul.mubr.f32.gmra.mrb[0].mxu0 %v2300
          %v2629 = vpop.f32.mrb[0].mxu0
          %v2630 = vadd.f32 %v2560, %v2629
          %v2631 = vpop.f32.mrb[0].mxu0
          %2632 = vdwg.mxu0
          %2633 = vmatprep.subr.mxu0 0.0
          %2634 = vmatpush1.msra.mxu0 %v2142
          %2635 = vmatprep.subr.mxu0 0.0
          %2636 = vmatpush1.msra.mxu0 %v2143
          %2637 = vmatprep.subr.mxu0 0.0
          %2638 = vmatpush1.msra.mxu0 %v2144
          %2639 = vmatprep.subr.mxu0 0.0
          %2640 = vmatpush1.msra.mxu0 %v2145
          %2641 = vmatprep.subr.mxu0 0.0
          %2642 = vmatpush1.msra.mxu0 %v2146
          %2643 = vmatprep.subr.mxu0 0.0
          %2644 = vmatpush1.msra.mxu0 %v2147
          %2645 = vmatprep.subr.mxu0 0.0
          %2646 = vmatpush1.msra.mxu0 %v2148
          %2647 = vmatprep.subr.mxu0 0.0
          %2648 = vmatpush1.msra.mxu0 %v2149
          %2649 = vmatprep.subr.mxu0 0.0
          %2650 = vmatpush1.msra.mxu0 %v2150
          %2651 = vmatprep.subr.mxu0 0.0
          %2652 = vmatpush1.msra.mxu0 %v2151
          %2653 = vmatprep.subr.mxu0 0.0
          %2654 = vmatpush1.msra.mxu0 %v2152
          %2655 = vmatprep.subr.mxu0 0.0
          %2656 = vmatpush1.msra.mxu0 %v2153
          %2657 = vmatprep.subr.mxu0 0.0
          %2658 = vmatpush1.msra.mxu0 %v2154
          %2659 = vmatprep.subr.mxu0 0.0
          %2660 = vmatpush1.msra.mxu0 %v2155
          %2661 = vmatprep.subr.mxu0 0.0
          %2662 = vmatpush1.msra.mxu0 %v2156
          %2663 = vmatprep.subr.mxu0 0.0
          %2664 = vmatpush1.msra.mxu0 %v2157
          %2665 = vmatprep.subr.mxu0 0.0
          %2666 = vmatpush1.msra.mxu0 %v2158
          %2667 = vmatprep.subr.mxu0 0.0
          %2668 = vmatpush1.msra.mxu0 %v2159
          %2669 = vmatprep.subr.mxu0 0.0
          %2670 = vmatpush1.msra.mxu0 %v2160
          %2671 = vmatprep.subr.mxu0 0.0
          %2672 = vmatpush1.msra.mxu0 %v2161
          %2673 = vmatprep.subr.mxu0 0.0
          %2674 = vmatpush1.msra.mxu0 %v2162
          %2675 = vmatprep.subr.mxu0 0.0
          %2676 = vmatpush1.msra.mxu0 %v2163
          %2677 = vmatprep.subr.mxu0 0.0
          %2678 = vmatpush1.msra.mxu0 %v2164
          %2679 = vmatprep.subr.mxu0 0.0
          %2680 = vmatpush1.msra.mxu0 %v2165
          %2681 = vmatprep.subr.mxu0 0.0
          %2682 = vmatpush1.msra.mxu0 %v2166
          %2683 = vmatprep.subr.mxu0 0.0
          %2684 = vmatpush1.msra.mxu0 %v2167
          %2685 = vmatprep.subr.mxu0 0.0
          %2686 = vmatpush1.msra.mxu0 %v2168
          %2687 = vmatprep.subr.mxu0 0.0
          %2688 = vmatpush1.msra.mxu0 %v2169
          %2689 = vmatprep.subr.mxu0 0.0
          %2690 = vmatpush1.msra.mxu0 %v2170
          %2691 = vmatprep.subr.mxu0 0.0
          %2692 = vmatpush1.msra.mxu0 %v2171
          %2693 = vmatprep.subr.mxu0 0.0
          %2694 = vmatpush1.msra.mxu0 %v2172
          %2695 = vmatprep.subr.mxu0 0.0
          %2696 = vmatpush1.msra.mxu0 %v2173
          %2697 = vmatprep.mubr.f32.mxu0 %v2312
          %2698 = vmatmul.mubr.f32.gmra.mrb[0].mxu0 %v2308
          %v2699 = vpop.f32.mrb[0].mxu0
          %v2700 = vadd.f32 %v2630, %v2699
          %v2701 = vpop.f32.mrb[0].mxu0
          %2702 = vdwg.mxu0
          %2703 = vmatprep.subr.mxu0 0.0
          %2704 = vmatpush1.msra.mxu0 %v2174
          %2705 = vmatprep.subr.mxu0 0.0
          %2706 = vmatpush1.msra.mxu0 %v2175
          %2707 = vmatprep.subr.mxu0 0.0
          %2708 = vmatpush1.msra.mxu0 %v2176
          %2709 = vmatprep.subr.mxu0 0.0
          %2710 = vmatpush1.msra.mxu0 %v2177
          %2711 = vmatprep.subr.mxu0 0.0
          %2712 = vmatpush1.msra.mxu0 %v2178
          %2713 = vmatprep.subr.mxu0 0.0
          %2714 = vmatpush1.msra.mxu0 %v2179
          %2715 = vmatprep.subr.mxu0 0.0
          %2716 = vmatpush1.msra.mxu0 %v2180
          %2717 = vmatprep.subr.mxu0 0.0
          %2718 = vmatpush1.msra.mxu0 %v2181
          %2719 = vmatprep.subr.mxu0 0.0
          %2720 = vmatpush1.msra.mxu0 %v2182
          %2721 = vmatprep.subr.mxu0 0.0
          %2722 = vmatpush1.msra.mxu0 %v2183
          %2723 = vmatprep.subr.mxu0 0.0
          %2724 = vmatpush1.msra.mxu0 %v2184
          %2725 = vmatprep.subr.mxu0 0.0
          %2726 = vmatpush1.msra.mxu0 %v2185
          %2727 = vmatprep.subr.mxu0 0.0
          %2728 = vmatpush1.msra.mxu0 %v2186
          %2729 = vmatprep.subr.mxu0 0.0
          %2730 = vmatpush1.msra.mxu0 %v2187
          %2731 = vmatprep.subr.mxu0 0.0
          %2732 = vmatpush1.msra.mxu0 %v2188
          %2733 = vmatprep.subr.mxu0 0.0
          %2734 = vmatpush1.msra.mxu0 %v2189
          %2735 = vmatprep.subr.mxu0 0.0
          %2736 = vmatpush1.msra.mxu0 %v2190
          %2737 = vmatprep.subr.mxu0 0.0
          %2738 = vmatpush1.msra.mxu0 %v2191
          %2739 = vmatprep.subr.mxu0 0.0
          %2740 = vmatpush1.msra.mxu0 %v2192
          %2741 = vmatprep.subr.mxu0 0.0
          %2742 = vmatpush1.msra.mxu0 %v2193
          %2743 = vmatprep.subr.mxu0 0.0
          %2744 = vmatpush1.msra.mxu0 %v2194
          %2745 = vmatprep.subr.mxu0 0.0
          %2746 = vmatpush1.msra.mxu0 %v2195
          %2747 = vmatprep.subr.mxu0 0.0
          %2748 = vmatpush1.msra.mxu0 %v2196
          %2749 = vmatprep.subr.mxu0 0.0
          %2750 = vmatpush1.msra.mxu0 %v2197
          %2751 = vmatprep.subr.mxu0 0.0
          %2752 = vmatpush1.msra.mxu0 %v2198
          %2753 = vmatprep.subr.mxu0 0.0
          %2754 = vmatpush1.msra.mxu0 %v2199
          %2755 = vmatprep.subr.mxu0 0.0
          %2756 = vmatpush1.msra.mxu0 %v2200
          %2757 = vmatprep.subr.mxu0 0.0
          %2758 = vmatpush1.msra.mxu0 %v2201
          %2759 = vmatprep.subr.mxu0 0.0
          %2760 = vmatpush1.msra.mxu0 %v2202
          %2761 = vmatprep.subr.mxu0 0.0
          %2762 = vmatpush1.msra.mxu0 %v2203
          %2763 = vmatprep.subr.mxu0 0.0
          %2764 = vmatpush1.msra.mxu0 %v2204
          %2765 = vmatprep.subr.mxu0 0.0
          %2766 = vmatpush1.msra.mxu0 %v2205
          %2767 = vmatprep.mubr.f32.mxu0 %v2320
          %2768 = vmatmul.mubr.f32.gmra.mrb[0].mxu0 %v2316
          %v2769 = vpop.f32.mrb[0].mxu0
          %v2770 = vadd.f32 %v2700, %v2769
          %v2771 = vpop.f32.mrb[0].mxu0
          %2772 = vdwg.mxu0
          %2773 = vmatprep.subr.mxu0 0.0
          %2774 = vmatpush1.msra.mxu0 %v2206
          %2775 = vmatprep.subr.mxu0 0.0
          %2776 = vmatpush1.msra.mxu0 %v2207
          %2777 = vmatprep.subr.mxu0 0.0
          %2778 = vmatpush1.msra.mxu0 %v2208
          %2779 = vmatprep.subr.mxu0 0.0
          %2780 = vmatpush1.msra.mxu0 %v2209
          %2781 = vmatprep.subr.mxu0 0.0
          %2782 = vmatpush1.msra.mxu0 %v2210
          %2783 = vmatprep.subr.mxu0 0.0
          %2784 = vmatpush1.msra.mxu0 %v2211
          %2785 = vmatprep.subr.mxu0 0.0
          %2786 = vmatpush1.msra.mxu0 %v2212
          %2787 = vmatprep.subr.mxu0 0.0
          %2788 = vmatpush1.msra.mxu0 %v2213
          %2789 = vmatprep.subr.mxu0 0.0
          %2790 = vmatpush1.msra.mxu0 %v2214
          %2791 = vmatprep.subr.mxu0 0.0
          %2792 = vmatpush1.msra.mxu0 %v2215
          %2793 = vmatprep.subr.mxu0 0.0
          %2794 = vmatpush1.msra.mxu0 %v2216
          %2795 = vmatprep.subr.mxu0 0.0
          %2796 = vmatpush1.msra.mxu0 %v2217
          %2797 = vmatprep.subr.mxu0 0.0
          %2798 = vmatpush1.msra.mxu0 %v2218
          %2799 = vmatprep.subr.mxu0 0.0
          %2800 = vmatpush1.msra.mxu0 %v2219
          %2801 = vmatprep.subr.mxu0 0.0
          %2802 = vmatpush1.msra.mxu0 %v2220
          %2803 = vmatprep.subr.mxu0 0.0
          %2804 = vmatpush1.msra.mxu0 %v2221
          %2805 = vmatprep.subr.mxu0 0.0
          %2806 = vmatpush1.msra.mxu0 %v2222
          %2807 = vmatprep.subr.mxu0 0.0
          %2808 = vmatpush1.msra.mxu0 %v2223
          %2809 = vmatprep.subr.mxu0 0.0
          %2810 = vmatpush1.msra.mxu0 %v2224
          %2811 = vmatprep.subr.mxu0 0.0
          %2812 = vmatpush1.msra.mxu0 %v2225
          %2813 = vmatprep.subr.mxu0 0.0
          %2814 = vmatpush1.msra.mxu0 %v2226
          %2815 = vmatprep.subr.mxu0 0.0
          %2816 = vmatpush1.msra.mxu0 %v2227
          %2817 = vmatprep.subr.mxu0 0.0
          %2818 = vmatpush1.msra.mxu0 %v2228
          %2819 = vmatprep.subr.mxu0 0.0
          %2820 = vmatpush1.msra.mxu0 %v2229
          %2821 = vmatprep.subr.mxu0 0.0
          %2822 = vmatpush1.msra.mxu0 %v2230
          %2823 = vmatprep.subr.mxu0 0.0
          %2824 = vmatpush1.msra.mxu0 %v2231
          %2825 = vmatprep.subr.mxu0 0.0
          %2826 = vmatpush1.msra.mxu0 %v2232
          %2827 = vmatprep.subr.mxu0 0.0
          %2828 = vmatpush1.msra.mxu0 %v2233
          %2829 = vmatprep.subr.mxu0 0.0
          %2830 = vmatpush1.msra.mxu0 %v2234
          %2831 = vmatprep.subr.mxu0 0.0
          %2832 = vmatpush1.msra.mxu0 %v2235
          %2833 = vmatprep.subr.mxu0 0.0
          %2834 = vmatpush1.msra.mxu0 %v2236
          %2835 = vmatprep.subr.mxu0 0.0
          %2836 = vmatpush1.msra.mxu0 %v2237
          %2837 = vmatprep.mubr.f32.mxu0 %v2328
          %2838 = vmatmul.mubr.f32.gmra.mrb[0].mxu0 %v2324
          %v2839 = vpop.f32.mrb[0].mxu0
          %v2840 = vadd.f32 %v2770, %v2839
          %v2841 = vpop.f32.mrb[0].mxu0
          %2842 = vdwg.mxu0
          %2843 = vmatprep.subr.mxu0 0.0
          %2844 = vmatpush1.msra.mxu0 %v2238
          %2845 = vmatprep.subr.mxu0 0.0
          %2846 = vmatpush1.msra.mxu0 %v2239
          %2847 = vmatprep.subr.mxu0 0.0
          %2848 = vmatpush1.msra.mxu0 %v2240
          %2849 = vmatprep.subr.mxu0 0.0
          %2850 = vmatpush1.msra.mxu0 %v2241
          %2851 = vmatprep.subr.mxu0 0.0
          %2852 = vmatpush1.msra.mxu0 %v2242
          %2853 = vmatprep.subr.mxu0 0.0
          %2854 = vmatpush1.msra.mxu0 %v2243
          %2855 = vmatprep.subr.mxu0 0.0
          %2856 = vmatpush1.msra.mxu0 %v2244
          %2857 = vmatprep.subr.mxu0 0.0
          %2858 = vmatpush1.msra.mxu0 %v2245
          %2859 = vmatprep.subr.mxu0 0.0
          %2860 = vmatpush1.msra.mxu0 %v2246
          %2861 = vmatprep.subr.mxu0 0.0
          %2862 = vmatpush1.msra.mxu0 %v2247
          %2863 = vmatprep.subr.mxu0 0.0
          %2864 = vmatpush1.msra.mxu0 %v2248
          %2865 = vmatprep.subr.mxu0 0.0
          %2866 = vmatpush1.msra.mxu0 %v2249
          %2867 = vmatprep.subr.mxu0 0.0
          %2868 = vmatpush1.msra.mxu0 %v2250
          %2869 = vmatprep.subr.mxu0 0.0
          %2870 = vmatpush1.msra.mxu0 %v2251
          %2871 = vmatprep.subr.mxu0 0.0
          %2872 = vmatpush1.msra.mxu0 %v2252
          %2873 = vmatprep.subr.mxu0 0.0
          %2874 = vmatpush1.msra.mxu0 %v2253
          %2875 = vmatprep.subr.mxu0 0.0
          %2876 = vmatpush1.msra.mxu0 %v2254
          %2877 = vmatprep.subr.mxu0 0.0
          %2878 = vmatpush1.msra.mxu0 %v2255
          %2879 = vmatprep.subr.mxu0 0.0
          %2880 = vmatpush1.msra.mxu0 %v2256
          %2881 = vmatprep.subr.mxu0 0.0
          %2882 = vmatpush1.msra.mxu0 %v2257
          %2883 = vmatprep.subr.mxu0 0.0
          %2884 = vmatpush1.msra.mxu0 %v2258
          %2885 = vmatprep.subr.mxu0 0.0
          %2886 = vmatpush1.msra.mxu0 %v2259
          %2887 = vmatprep.subr.mxu0 0.0
          %2888 = vmatpush1.msra.mxu0 %v2260
          %2889 = vmatprep.subr.mxu0 0.0
          %2890 = vmatpush1.msra.mxu0 %v2261
          %2891 = vmatprep.subr.mxu0 0.0
          %2892 = vmatpush1.msra.mxu0 %v2262
          %2893 = vmatprep.subr.mxu0 0.0
          %2894 = vmatpush1.msra.mxu0 %v2263
          %2895 = vmatprep.subr.mxu0 0.0
          %2896 = vmatpush1.msra.mxu0 %v2264
          %2897 = vmatprep.subr.mxu0 0.0
          %2898 = vmatpush1.msra.mxu0 %v2265
          %2899 = vmatprep.subr.mxu0 0.0
          %2900 = vmatpush1.msra.mxu0 %v2266
          %2901 = vmatprep.subr.mxu0 0.0
          %2902 = vmatpush1.msra.mxu0 %v2267
          %2903 = vmatprep.subr.mxu0 0.0
          %2904 = vmatpush1.msra.mxu0 %v2268
          %2905 = vmatprep.subr.mxu0 0.0
          %2906 = vmatpush1.msra.mxu0 %v2269
          %2907 = vmatprep.mubr.f32.mxu0 %v2336
          %2908 = vmatmul.mubr.f32.gmra.mrb[0].mxu0 %v2332
          %v2909 = vpop.f32.mrb[0].mxu0
          %v2910 = vadd.f32 %v2840, %v2909
          %v2911 = vpop.f32.mrb[0].mxu0
          %2912 = vdwg.mxu0
          %2913 = vst [vmem:[%s314] sm:$0x1] %v2910
        $region68: #{tpu_custom_call.1} parent=39 // pred_fallthru
          _
        %s2914 = sand.u32 %s156, 1
        %s2915 = scalar_lea.sflag [#allocation5], %s2914
        %s2916 = sand.u32 %s156, 1
        %s2917 = scalar_lea.vmem [#allocation12], %s2916
        // Predicated region
        $region69: #{tpu_custom_call.1} parent=39 // pred_check
          %p2918 = pneg %p166
        $region70: #{tpu_custom_call.1} parent=39 // pred_check_branch
          %2920 = sbr.rel (%p2918) target = $region72
        $region71: #{tpu_custom_call.1} parent=39 // pred_region
          %s2922 = ssub.s32 16, 16
          %2923 = vsyncadd %s2915, %s2922
          %s2924 = smul.addr %s28, 16
          %s2925 = scalar_lea.hbm %s5, %s2924
          %s2927 = sshll.u32 %s2917, 4
          %s2928 = int_to_ptr.vmem [resolvable:$true] %s2927
          %2930 = dma.vmem_to_hbm [thread:$0]  %s2928, 16, %s2925, %s2915
        $region72: #{tpu_custom_call.1} parent=39 // pred_fallthru
          _
      $region40: #{tpu_custom_call.1} parent=5 // pred_fallthru
        _
      %p2931 = scmp.le.s32.totalorder 2, %s19
      // Predicated region
      $region73: #{tpu_custom_call.1} parent=5 // pred_check
        %p2932 = pneg %p2931
      $region74: #{tpu_custom_call.1} parent=5 // pred_check_branch
        %2934 = sbr.rel (%p2932) target = $region76
      $region75: #{tpu_custom_call.1} parent=5 // pred_region
        %s2935 = ssub.s32 %s19, 2
        // Predicated region
        $region77: #{tpu_custom_call.1} parent=75 // pred_check
          %p2936 = pneg %p172
        $region78: #{tpu_custom_call.1} parent=75 // pred_check_branch
          %2938 = sbr.rel (%p2936) target = $region80
        $region79: #{tpu_custom_call.1} parent=75 // pred_region
          %s2939 = sand.u32 %s157, 1
          %s2940 = scalar_lea.sflag [#allocation5], %s2939
          %s2941 = sand.u32 %s157, 1
          %s2942 = scalar_lea.vmem [#allocation12], %s2941
          %2943 = dma.done %s2940, 16
        $region80: #{tpu_custom_call.1} parent=75 // pred_fallthru
          _
      $region76: #{tpu_custom_call.1} parent=5 // pred_fallthru
        _
    $region6: #{tpu_custom_call.1} parent=1 // loop_footer
      %s23 = sadd.s32 1, %s19
    $region7: #{tpu_custom_call.1} parent=1 // loop_footer_branch
      %18 = sbr.rel target = $region3
    $region8: #{tpu_custom_call.1} parent=1 // loop_exit
      _
    %2944 = vsyncpa [#allocation4], 1
    %s2945 = scalar_lea.sflag [#allocation4], 1
    %2946 = vsyncpa %s2945, 1
    %2947 = vsyncpa [#allocation7], 1
    %2948 = vsyncpa [#allocation10], 1
    %2949 = vsyncpa [#allocation5], 1
    %s2950 = scalar_lea.sflag [#allocation5], 1
    %2951 = vsyncpa %s2950, 1

</llo_original>
